<compile_context>
chip_gen: v5e
topology: v5e:2x2
jax: 0.10.0
libtpu: 0.0.40
codegen_flags: <defaults>
</compile_context>

<pallas_src>
import functools

import jax
import jax.numpy as jnp
from jax import lax
from jax.experimental import pallas as pl
from jax.experimental.pallas import tpu as pltpu


# ----------------------------------------------------------------------------
# Pallas kernel
# ----------------------------------------------------------------------------
def _gated_conv_kernel(vref,      # (1, n_vrows*C, TQ) bf16  dy-shifted vertical stack (row-padded, flat)
                       href,      # (1, C,         TQ) f32   horizontal stack (row-padded, flat)
                       wv_ref,    # (k, 2C, n_vrows*C) bf16  vertical weights, one (2C, n_vrows*C) per dx
                       wh_ref,    # (n_h, 2C, C)       bf16  horizontal weights per dx (center tap zero for 'A')
                       wvtoh_ref, # (2C, 2C)           f32
                       whtoh_ref, # (C, C)             f32
                       out_ref,   # (1, 2C, TQ)        f32   [v_gated ; h_out]
                       sh_ref,    # (2C, Wp + TQ)      f32   scratch: [carry row (Wp) | acc_v zone (TQ)]
                       *, C, k, padding, Wp, TQc, n_h):
    TQ = out_ref.shape[-1]

    # Start of a new image: zero the scratch (carry region == zero previous row).
    @pl.when(pl.program_id(1) == 0)
    def _init():
        sh_ref[...] = jnp.zeros_like(sh_ref)

    # ---- vertical conv: k lane-shifted window reads, K = n_vrows*C each ----
    acc_v = jnp.dot(wv_ref[0], vref[0, :, pl.ds(0, TQc)],
                    preferred_element_type=jnp.float32)              # (2C, TQc)
    for dx in range(1, k):
        acc_v = acc_v + jnp.dot(wv_ref[dx], vref[0, :, pl.ds(dx, TQc)],
                                preferred_element_type=jnp.float32)

    # ---- horizontal conv: taps dx = 0..k//2 ; center tap (dx == padding) is hx ----
    residual = None
    acc_h = None
    for dx in range(n_h):
        h_tap = href[0, :, pl.ds(dx, TQc)]                           # (C, TQc) f32
        if dx == padding:
            residual = h_tap                                         # exact f32 residual
        contrib = jnp.dot(wh_ref[dx], h_tap.astype(jnp.bfloat16),
                          preferred_element_type=jnp.float32)
        acc_h = contrib if acc_h is None else acc_h + contrib        # (2C, TQc)

    # ---- vtoh(down_shift(vconv)) : shift acc_v down by one image row (Wp lanes)
    # via the scratch so it is a plain window read; first row comes from the
    # carry (previous tile's last image row, or zero for the first row).
    sh_ref[:, pl.ds(Wp, TQc)] = acc_v
    v_shift = sh_ref[:, pl.ds(0, TQc)]                               # (2C, TQc)
    sh_ref[:, :Wp] = sh_ref[:, pl.ds(TQ, Wp)]                        # carry last image row
    acc_h = acc_h + jnp.dot(wvtoh_ref[...], v_shift,
                            preferred_element_type=jnp.float32)

    # ---- gating + 1x1 htoh + residual (f32) ----
    v_gate = jnp.tanh(acc_v[:C]) * jax.nn.sigmoid(acc_v[C:])
    h_gate = jnp.tanh(acc_h[:C]) * jax.nn.sigmoid(acc_h[C:])
    h_out = residual + jnp.dot(whtoh_ref[...], h_gate,
                               preferred_element_type=jnp.float32)

    # Two small sublane stores (kept as slices for lowering robustness; the last
    # k-1 lanes of the tile are right-pad garbage columns and stay unwritten).
    out_ref[0, :C, :TQc] = v_gate.astype(out_ref.dtype)
    out_ref[0, C:, :TQc] = h_out.astype(out_ref.dtype)


# ----------------------------------------------------------------------------
# Parameter construction / masking (plain JAX glue)
# ----------------------------------------------------------------------------
def init_params(key, in_channels, out_channels, k=7):
    k0, k1, k2, k3 = jax.random.split(key, 4)
    return {
        # PyTorch OIHW weight layouts
        "vertical":   0.1 * jax.random.normal(k0, (2 * out_channels, in_channels, k, k), jnp.float32),
        "horizontal": 0.1 * jax.random.normal(k1, (2 * out_channels, in_channels, 1, k), jnp.float32),
        "vtoh":       0.1 * jax.random.normal(k2, (2 * out_channels, 2 * out_channels, 1, 1), jnp.float32),
        "htoh":       0.1 * jax.random.normal(k3, (out_channels, out_channels, 1, 1), jnp.float32),
    }


def masked_conv_weights(params, mask_type, k):
    wv = params["vertical"]
    wh = params["horizontal"]
    vmask = jnp.ones_like(wv).at[:, :, k // 2 + 1:, :].set(0.0)
    hmask = jnp.ones_like(wh).at[:, :, :, k // 2 + 1:].set(0.0)
    if mask_type == "A":
        hmask = hmask.at[:, :, :, k // 2].set(0.0)
    return wv * vmask, wh * hmask


def _vmem_capacity_bytes():
    try:
        return int(pltpu.get_tpu_info().vmem_capacity_bytes)
    except Exception:
        return 64 * 1024 * 1024   # conservative (v7x per-core) fallback


def _pick_row_tile(H, Wp, bytes_per_lane, budget, batch):
    """Largest whole-row tile (divisor of H) whose double-buffered streams fit."""
    th = 1
    for cand in range(1, H + 1):
        if H % cand:
            continue
        tq = cand * Wp
        if cand != H and tq % 128 != 0:
            continue                      # keep non-full blocks lane-dense / BlockSpec-legal
        if 2 * tq * bytes_per_lane <= budget:
            th = cand
    if batch == 1 and th == H and H > 1:
        # v7x has 2 TensorCores; make sure the grid has >= 2 steps.
        for cand in range(H - 1, 0, -1):
            if H % cand == 0 and (cand * Wp) % 128 == 0 and 2 * cand * Wp * bytes_per_lane <= budget:
                th = cand
                break
    return th


# ----------------------------------------------------------------------------
# Wrapper (NCHW in / NCHW out, like the nn.Module)
# ----------------------------------------------------------------------------
def gated_conv2d_pallas(x_nchw, params, mask_type="B", k=7, padding=3):
    assert padding == k // 2, "kernel assumes 'same' padding (padding == k//2)"
    B, C2, H, W = x_nchw.shape
    assert C2 % 2 == 0
    C = C2 // 2
    n_vrows = k // 2 + 1          # non-zero vertical kernel rows (dy <= k//2)
    n_h = k // 2 + 1              # horizontal taps dx <= k//2 (center weight zero for mask 'A')

    # Padded row width; round up slightly so H*Wp is a multiple of 128 when cheap.
    Wp0 = W + 2 * padding
    Wp = Wp0
    for extra in range(0, 33):
        if (H * (Wp0 + extra)) % 128 == 0:
            Wp = Wp0 + extra
            break

    # ---- weight prep (non-zero taps only) ----
    wv_m, wh_m = masked_conv_weights(params, mask_type, k)
    # (2C, C, dy, dx) -> (dx, 2C, dy, C) -> (k, 2C, n_vrows*C)
    wv = jnp.transpose(wv_m[:, :, :n_vrows, :], (3, 0, 2, 1))
    wv = wv.reshape(k, 2 * C, n_vrows * C).astype(jnp.bfloat16)
    # (2C, C, 1, dx) -> (dx, 2C, C)
    wh = jnp.transpose(wh_m[:, :, 0, :n_h], (2, 0, 1)).astype(jnp.bfloat16)
    wvtoh = params["vtoh"][:, :, 0, 0].astype(jnp.float32)   # (2C, 2C) OI
    whtoh = params["htoh"][:, :, 0, 0].astype(jnp.float32)   # (C, C)  OI

    # ---- data prep: dy-partial im2col of vx, row-padded flat layout (NCHW is
    # already channel-planar, so no transposes are needed) ----
    x = x_nchw.astype(jnp.float32)
    vx, hx = x[:, :C], x[:, C:]
    pad_r = Wp - (W + padding)
    vx_p = jnp.pad(vx, ((0, 0), (0, 0), (padding, 0), (padding, pad_r)))   # (B, C, H+pad, Wp)
    vrows = jnp.concatenate([vx_p[:, :, dy:dy + H, :] for dy in range(n_vrows)], axis=1)
    vflat = vrows.reshape(B, n_vrows * C, H * Wp).astype(jnp.bfloat16)     # (B, 4C, H*Wp)
    hx_p = jnp.pad(hx, ((0, 0), (0, 0), (0, 0), (padding, pad_r)))
    hflat = hx_p.reshape(B, C, H * Wp)                                     # (B, C, H*Wp) f32

    # ---- tiling: whole image rows per step, VMEM-budget aware ----
    vmem_cap = _vmem_capacity_bytes()
    vmem_limit = min(vmem_cap // 2, 64 * 1024 * 1024)
    bytes_per_lane = (n_vrows * C) * 2 + C * 4 + (2 * C) * 4   # v bf16 + h f32 + out f32
    budget = vmem_limit // 4                                    # 2x buffers + temporaries headroom
    TH = _pick_row_tile(H, Wp, bytes_per_lane, budget, B)
    NT = H // TH
    TQ = TH * Wp
    TQc = TQ - (k - 1)   # compute width: last k-1 lanes of a tile are right-pad garbage

    kernel = functools.partial(_gated_conv_kernel, C=C, k=k, padding=padding,
                               Wp=Wp, TQc=TQc, n_h=n_h)

    out_flat = pl.pallas_call(
        kernel,
        out_shape=jax.ShapeDtypeStruct((B, 2 * C, H * Wp), jnp.float32),
        grid=(B, NT),
        in_specs=[
            pl.BlockSpec((1, n_vrows * C, TQ), lambda b, n: (b, 0, n)),
            pl.BlockSpec((1, C, TQ), lambda b, n: (b, 0, n)),
            pl.BlockSpec((k, 2 * C, n_vrows * C), lambda b, n: (0, 0, 0)),   # resident weights
            pl.BlockSpec((n_h, 2 * C, C), lambda b, n: (0, 0, 0)),
            pl.BlockSpec((2 * C, 2 * C), lambda b, n: (0, 0)),
            pl.BlockSpec((C, C), lambda b, n: (0, 0)),
        ],
        out_specs=pl.BlockSpec((1, 2 * C, TQ), lambda b, n: (b, 0, n)),
        scratch_shapes=[pltpu.VMEM((2 * C, Wp + TQ), jnp.float32)],
        compiler_params=pltpu.CompilerParams(
            dimension_semantics=("parallel", "arbitrary"),
            vmem_limit_bytes=vmem_limit,
        ),
    )(vflat, hflat, wv, wh, wvtoh, whtoh)

    # (B, 2C, H*Wp) -> NCHW; drop the per-row right padding.
    return out_flat.reshape(B, 2 * C, H, Wp)[:, :, :, :W]


# ----------------------------------------------------------------------------
# Pure-JAX reference (for correctness checking only)
# ----------------------------------------------------------------------------
def gated_conv2d_ref(x, params, mask_type="B", k=7, padding=3):
    wv_m, wh_m = masked_conv_weights(params, mask_type, k)
    dn = ("NCHW", "OIHW", "NCHW")
    vx, hx = jnp.split(x, 2, axis=1)
    vconv = lax.conv_general_dilated(vx, wv_m, (1, 1),
                                     ((padding, padding), (padding, padding)),
                                     dimension_numbers=dn)
    hconv = lax.conv_general_dilated(hx, wh_m, (1, 1),
                                     ((0, 0), (padding, padding)),
                                     dimension_numbers=dn)
    shifted = jnp.pad(vconv[:, :, :-1, :], ((0, 0), (0, 0), (1, 0), (0, 0)))
    hconv = hconv + lax.conv_general_dilated(shifted, params["vtoh"], (1, 1),
                                             ((0, 0), (0, 0)), dimension_numbers=dn)
    v1, v2 = jnp.split(vconv, 2, axis=1)
    vg = jnp.tanh(v1) * jax.nn.sigmoid(v2)
    h1, h2 = jnp.split(hconv, 2, axis=1)
    hg = jnp.tanh(h1) * jax.nn.sigmoid(h2)
    hg = lax.conv_general_dilated(hg, params["htoh"], (1, 1),
                                  ((0, 0), (0, 0)), dimension_numbers=dn)
    return jnp.concatenate([vg, hx + hg], axis=1)


if __name__ == "__main__":
    key = jax.random.PRNGKey(0)
    k_x, k_p = jax.random.split(key)

    B, C, H, W = 2, 4, 16, 16            # in_channels = out_channels = 4
    mask_type = "B"
    x = jax.random.normal(k_x, (B, 2 * C, H, W), jnp.float32)   # NCHW
    params = init_params(k_p, in_channels=C, out_channels=C, k=7)

    out = gated_conv2d_pallas(x, params, mask_type=mask_type)
    out = jax.block_until_ready(out)

    ref = jax.block_until_ready(gated_conv2d_ref(x, params, mask_type=mask_type))
    assert out.shape == (B, 2 * C, H, W)
    # Conv GEMM operands run in bf16 (f32 accumulation) on the MXU; gating,
    # vtoh/htoh and the residual are exact f32.
    max_err = jnp.max(jnp.abs(out - ref))
    assert jnp.allclose(out, ref, atol=3e-2, rtol=3e-2), f"max abs err {max_err}"
    print("KERNEL_OK")
</pallas_src>

<mosaic_0001>
module attributes {stable_mosaic.version = 11 : i64} {
  func.func @_gated_conv_kernel(%arg0: i32, %arg1: i32, %arg2: memref<1x16x384xbf16, #tpu.memory_space<vmem>>, %arg3: memref<1x4x384xf32, #tpu.memory_space<vmem>>, %arg4: memref<7x8x16xbf16, #tpu.memory_space<vmem>>, %arg5: memref<4x8x4xbf16, #tpu.memory_space<vmem>>, %arg6: memref<8x8xf32, #tpu.memory_space<vmem>>, %arg7: memref<4x4xf32, #tpu.memory_space<vmem>>, %arg8: memref<1x8x384xf32, #tpu.memory_space<vmem>>, %arg9: memref<8x408xf32, #tpu.memory_space<vmem>>) attributes {dimension_semantics = [#tpu.dimension_semantics<parallel>, #tpu.dimension_semantics<arbitrary>], iteration_bounds = array<i64: 2, 1>, scalar_prefetch = 0 : i64, scratch_operands = 1 : i64, tpu.core_type = #tpu.core_type<tc>, window_params = [{transform_indices = @transform_0, window_bounds = array<i64: 1, 16, 384>}, {transform_indices = @transform_1, window_bounds = array<i64: 1, 4, 384>}, {pipeline_mode = #tpu.pipeline_mode<synchronous>, transform_indices = @transform_2, window_bounds = array<i64: 7, 8, 16>}, {pipeline_mode = #tpu.pipeline_mode<synchronous>, transform_indices = @transform_3, window_bounds = array<i64: 4, 8, 4>}, {pipeline_mode = #tpu.pipeline_mode<synchronous>, transform_indices = @transform_4, window_bounds = array<i64: 8, 8>}, {pipeline_mode = #tpu.pipeline_mode<synchronous>, transform_indices = @transform_5, window_bounds = array<i64: 4, 4>}, {transform_indices = @transform_6, window_bounds = array<i64: 1, 8, 384>}]} {
    %c0_i32 = arith.constant 0 : i32
    %0 = arith.cmpi eq, %arg1, %c0_i32 : i32
    %1 = arith.extui %0 : i1 to i32
    %c0_i32_0 = arith.constant 0 : i32
    %2 = arith.cmpi ne, %1, %c0_i32_0 : i32
    scf.if %2 {
      %cst_90 = arith.constant 0.000000e+00 : f32
      %105 = vector.broadcast %cst_90 : f32 to vector<8x408xf32>
      %c0_91 = arith.constant 0 : index
      %c0_92 = arith.constant 0 : index
      %106 = vector.load %arg9[%c0_91, %c0_92] : memref<8x408xf32, #tpu.memory_space<vmem>>, vector<8x408xf32>
      tpu.vector_store %arg9[%c0_91, %c0_92], %105 {strides = array<i32>} : memref<8x408xf32, #tpu.memory_space<vmem>>, vector<8x408xf32>,
    } else {
    }
    %c0 = arith.constant 0 : index
    %c0_1 = arith.constant 0 : index
    %c0_2 = arith.constant 0 : index
    %3 = vector.load %arg4[%c0, %c0_1, %c0_2] : memref<7x8x16xbf16, #tpu.memory_space<vmem>>, vector<1x8x16xbf16>
    %4 = vector.shape_cast %3 : vector<1x8x16xbf16> to vector<8x16xbf16>
    %c0_3 = arith.constant 0 : index
    %c0_4 = arith.constant 0 : index
    %c0_5 = arith.constant 0 : index
    %5 = vector.load %arg2[%c0_3, %c0_4, %c0_5] : memref<1x16x384xbf16, #tpu.memory_space<vmem>>, vector<1x16x378xbf16>
    %6 = vector.shape_cast %5 : vector<1x16x378xbf16> to vector<16x378xbf16>
    %cst = arith.constant dense<0.000000e+00> : vector<8x378xf32>
    %7 = tpu.matmul %4, %6, %cst {dimension_numbers = #tpu.dot_dimension_numbers<[1], [0], [0], [1], [0, 0, 1, 1], [], []>} : vector<8x16xbf16>, vector<16x378xbf16>, vector<8x378xf32> -> vector<8x378xf32>
    %c1 = arith.constant 1 : index
    %c0_6 = arith.constant 0 : index
    %c0_7 = arith.constant 0 : index
    %8 = vector.load %arg4[%c1, %c0_6, %c0_7] : memref<7x8x16xbf16, #tpu.memory_space<vmem>>, vector<1x8x16xbf16>
    %9 = vector.shape_cast %8 : vector<1x8x16xbf16> to vector<8x16xbf16>
    %c0_8 = arith.constant 0 : index
    %c0_9 = arith.constant 0 : index
    %c1_10 = arith.constant 1 : index
    %10 = vector.load %arg2[%c0_8, %c0_9, %c1_10] : memref<1x16x384xbf16, #tpu.memory_space<vmem>>, vector<1x16x378xbf16>
    %11 = vector.shape_cast %10 : vector<1x16x378xbf16> to vector<16x378xbf16>
    %cst_11 = arith.constant dense<0.000000e+00> : vector<8x378xf32>
    %12 = tpu.matmul %9, %11, %cst_11 {dimension_numbers = #tpu.dot_dimension_numbers<[1], [0], [0], [1], [0, 0, 1, 1], [], []>} : vector<8x16xbf16>, vector<16x378xbf16>, vector<8x378xf32> -> vector<8x378xf32>
    %13 = arith.addf %7, %12 : vector<8x378xf32>
    %c2 = arith.constant 2 : index
    %c0_12 = arith.constant 0 : index
    %c0_13 = arith.constant 0 : index
    %14 = vector.load %arg4[%c2, %c0_12, %c0_13] : memref<7x8x16xbf16, #tpu.memory_space<vmem>>, vector<1x8x16xbf16>
    %15 = vector.shape_cast %14 : vector<1x8x16xbf16> to vector<8x16xbf16>
    %c0_14 = arith.constant 0 : index
    %c0_15 = arith.constant 0 : index
    %c2_16 = arith.constant 2 : index
    %16 = vector.load %arg2[%c0_14, %c0_15, %c2_16] : memref<1x16x384xbf16, #tpu.memory_space<vmem>>, vector<1x16x378xbf16>
    %17 = vector.shape_cast %16 : vector<1x16x378xbf16> to vector<16x378xbf16>
    %cst_17 = arith.constant dense<0.000000e+00> : vector<8x378xf32>
    %18 = tpu.matmul %15, %17, %cst_17 {dimension_numbers = #tpu.dot_dimension_numbers<[1], [0], [0], [1], [0, 0, 1, 1], [], []>} : vector<8x16xbf16>, vector<16x378xbf16>, vector<8x378xf32> -> vector<8x378xf32>
    %19 = arith.addf %13, %18 : vector<8x378xf32>
    %c3 = arith.constant 3 : index
    %c0_18 = arith.constant 0 : index
    %c0_19 = arith.constant 0 : index
    %20 = vector.load %arg4[%c3, %c0_18, %c0_19] : memref<7x8x16xbf16, #tpu.memory_space<vmem>>, vector<1x8x16xbf16>
    %21 = vector.shape_cast %20 : vector<1x8x16xbf16> to vector<8x16xbf16>
    %c0_20 = arith.constant 0 : index
    %c0_21 = arith.constant 0 : index
    %c3_22 = arith.constant 3 : index
    %22 = vector.load %arg2[%c0_20, %c0_21, %c3_22] : memref<1x16x384xbf16, #tpu.memory_space<vmem>>, vector<1x16x378xbf16>
    %23 = vector.shape_cast %22 : vector<1x16x378xbf16> to vector<16x378xbf16>
    %cst_23 = arith.constant dense<0.000000e+00> : vector<8x378xf32>
    %24 = tpu.matmul %21, %23, %cst_23 {dimension_numbers = #tpu.dot_dimension_numbers<[1], [0], [0], [1], [0, 0, 1, 1], [], []>} : vector<8x16xbf16>, vector<16x378xbf16>, vector<8x378xf32> -> vector<8x378xf32>
    %25 = arith.addf %19, %24 : vector<8x378xf32>
    %c4 = arith.constant 4 : index
    %c0_24 = arith.constant 0 : index
    %c0_25 = arith.constant 0 : index
    %26 = vector.load %arg4[%c4, %c0_24, %c0_25] : memref<7x8x16xbf16, #tpu.memory_space<vmem>>, vector<1x8x16xbf16>
    %27 = vector.shape_cast %26 : vector<1x8x16xbf16> to vector<8x16xbf16>
    %c0_26 = arith.constant 0 : index
    %c0_27 = arith.constant 0 : index
    %c4_28 = arith.constant 4 : index
    %28 = vector.load %arg2[%c0_26, %c0_27, %c4_28] : memref<1x16x384xbf16, #tpu.memory_space<vmem>>, vector<1x16x378xbf16>
    %29 = vector.shape_cast %28 : vector<1x16x378xbf16> to vector<16x378xbf16>
    %cst_29 = arith.constant dense<0.000000e+00> : vector<8x378xf32>
    %30 = tpu.matmul %27, %29, %cst_29 {dimension_numbers = #tpu.dot_dimension_numbers<[1], [0], [0], [1], [0, 0, 1, 1], [], []>} : vector<8x16xbf16>, vector<16x378xbf16>, vector<8x378xf32> -> vector<8x378xf32>
    %31 = arith.addf %25, %30 : vector<8x378xf32>
    %c5 = arith.constant 5 : index
    %c0_30 = arith.constant 0 : index
    %c0_31 = arith.constant 0 : index
    %32 = vector.load %arg4[%c5, %c0_30, %c0_31] : memref<7x8x16xbf16, #tpu.memory_space<vmem>>, vector<1x8x16xbf16>
    %33 = vector.shape_cast %32 : vector<1x8x16xbf16> to vector<8x16xbf16>
    %c0_32 = arith.constant 0 : index
    %c0_33 = arith.constant 0 : index
    %c5_34 = arith.constant 5 : index
    %34 = vector.load %arg2[%c0_32, %c0_33, %c5_34] : memref<1x16x384xbf16, #tpu.memory_space<vmem>>, vector<1x16x378xbf16>
    %35 = vector.shape_cast %34 : vector<1x16x378xbf16> to vector<16x378xbf16>
    %cst_35 = arith.constant dense<0.000000e+00> : vector<8x378xf32>
    %36 = tpu.matmul %33, %35, %cst_35 {dimension_numbers = #tpu.dot_dimension_numbers<[1], [0], [0], [1], [0, 0, 1, 1], [], []>} : vector<8x16xbf16>, vector<16x378xbf16>, vector<8x378xf32> -> vector<8x378xf32>
    %37 = arith.addf %31, %36 : vector<8x378xf32>
    %c6 = arith.constant 6 : index
    %c0_36 = arith.constant 0 : index
    %c0_37 = arith.constant 0 : index
    %38 = vector.load %arg4[%c6, %c0_36, %c0_37] : memref<7x8x16xbf16, #tpu.memory_space<vmem>>, vector<1x8x16xbf16>
    %39 = vector.shape_cast %38 : vector<1x8x16xbf16> to vector<8x16xbf16>
    %c0_38 = arith.constant 0 : index
    %c0_39 = arith.constant 0 : index
    %c6_40 = arith.constant 6 : index
    %40 = vector.load %arg2[%c0_38, %c0_39, %c6_40] : memref<1x16x384xbf16, #tpu.memory_space<vmem>>, vector<1x16x378xbf16>
    %41 = vector.shape_cast %40 : vector<1x16x378xbf16> to vector<16x378xbf16>
    %cst_41 = arith.constant dense<0.000000e+00> : vector<8x378xf32>
    %42 = tpu.matmul %39, %41, %cst_41 {dimension_numbers = #tpu.dot_dimension_numbers<[1], [0], [0], [1], [0, 0, 1, 1], [], []>} : vector<8x16xbf16>, vector<16x378xbf16>, vector<8x378xf32> -> vector<8x378xf32>
    %43 = arith.addf %37, %42 : vector<8x378xf32>
    %c0_42 = arith.constant 0 : index
    %c0_43 = arith.constant 0 : index
    %c0_44 = arith.constant 0 : index
    %44 = vector.load %arg3[%c0_42, %c0_43, %c0_44] : memref<1x4x384xf32, #tpu.memory_space<vmem>>, vector<1x4x378xf32>
    %45 = vector.shape_cast %44 : vector<1x4x378xf32> to vector<4x378xf32>
    %c0_45 = arith.constant 0 : index
    %c0_46 = arith.constant 0 : index
    %c0_47 = arith.constant 0 : index
    %46 = vector.load %arg5[%c0_45, %c0_46, %c0_47] : memref<4x8x4xbf16, #tpu.memory_space<vmem>>, vector<1x8x4xbf16>
    %47 = vector.shape_cast %46 : vector<1x8x4xbf16> to vector<8x4xbf16>
    %48 = arith.truncf %45 : vector<4x378xf32> to vector<4x378xbf16>
    %cst_48 = arith.constant dense<0.000000e+00> : vector<8x378xf32>
    %49 = tpu.matmul %47, %48, %cst_48 {dimension_numbers = #tpu.dot_dimension_numbers<[1], [0], [0], [1], [0, 0, 1, 1], [], []>} : vector<8x4xbf16>, vector<4x378xbf16>, vector<8x378xf32> -> vector<8x378xf32>
    %c0_49 = arith.constant 0 : index
    %c0_50 = arith.constant 0 : index
    %c1_51 = arith.constant 1 : index
    %50 = vector.load %arg3[%c0_49, %c0_50, %c1_51] : memref<1x4x384xf32, #tpu.memory_space<vmem>>, vector<1x4x378xf32>
    %51 = vector.shape_cast %50 : vector<1x4x378xf32> to vector<4x378xf32>
    %c1_52 = arith.constant 1 : index
    %c0_53 = arith.constant 0 : index
    %c0_54 = arith.constant 0 : index
    %52 = vector.load %arg5[%c1_52, %c0_53, %c0_54] : memref<4x8x4xbf16, #tpu.memory_space<vmem>>, vector<1x8x4xbf16>
    %53 = vector.shape_cast %52 : vector<1x8x4xbf16> to vector<8x4xbf16>
    %54 = arith.truncf %51 : vector<4x378xf32> to vector<4x378xbf16>
    %cst_55 = arith.constant dense<0.000000e+00> : vector<8x378xf32>
    %55 = tpu.matmul %53, %54, %cst_55 {dimension_numbers = #tpu.dot_dimension_numbers<[1], [0], [0], [1], [0, 0, 1, 1], [], []>} : vector<8x4xbf16>, vector<4x378xbf16>, vector<8x378xf32> -> vector<8x378xf32>
    %56 = arith.addf %49, %55 : vector<8x378xf32>
    %c0_56 = arith.constant 0 : index
    %c0_57 = arith.constant 0 : index
    %c2_58 = arith.constant 2 : index
    %57 = vector.load %arg3[%c0_56, %c0_57, %c2_58] : memref<1x4x384xf32, #tpu.memory_space<vmem>>, vector<1x4x378xf32>
    %58 = vector.shape_cast %57 : vector<1x4x378xf32> to vector<4x378xf32>
    %c2_59 = arith.constant 2 : index
    %c0_60 = arith.constant 0 : index
    %c0_61 = arith.constant 0 : index
    %59 = vector.load %arg5[%c2_59, %c0_60, %c0_61] : memref<4x8x4xbf16, #tpu.memory_space<vmem>>, vector<1x8x4xbf16>
    %60 = vector.shape_cast %59 : vector<1x8x4xbf16> to vector<8x4xbf16>
    %61 = arith.truncf %58 : vector<4x378xf32> to vector<4x378xbf16>
    %cst_62 = arith.constant dense<0.000000e+00> : vector<8x378xf32>
    %62 = tpu.matmul %60, %61, %cst_62 {dimension_numbers = #tpu.dot_dimension_numbers<[1], [0], [0], [1], [0, 0, 1, 1], [], []>} : vector<8x4xbf16>, vector<4x378xbf16>, vector<8x378xf32> -> vector<8x378xf32>
    %63 = arith.addf %56, %62 : vector<8x378xf32>
    %c0_63 = arith.constant 0 : index
    %c0_64 = arith.constant 0 : index
    %c3_65 = arith.constant 3 : index
    %64 = vector.load %arg3[%c0_63, %c0_64, %c3_65] : memref<1x4x384xf32, #tpu.memory_space<vmem>>, vector<1x4x378xf32>
    %65 = vector.shape_cast %64 : vector<1x4x378xf32> to vector<4x378xf32>
    %c3_66 = arith.constant 3 : index
    %c0_67 = arith.constant 0 : index
    %c0_68 = arith.constant 0 : index
    %66 = vector.load %arg5[%c3_66, %c0_67, %c0_68] : memref<4x8x4xbf16, #tpu.memory_space<vmem>>, vector<1x8x4xbf16>
    %67 = vector.shape_cast %66 : vector<1x8x4xbf16> to vector<8x4xbf16>
    %68 = arith.truncf %65 : vector<4x378xf32> to vector<4x378xbf16>
    %cst_69 = arith.constant dense<0.000000e+00> : vector<8x378xf32>
    %69 = tpu.matmul %67, %68, %cst_69 {dimension_numbers = #tpu.dot_dimension_numbers<[1], [0], [0], [1], [0, 0, 1, 1], [], []>} : vector<8x4xbf16>, vector<4x378xbf16>, vector<8x378xf32> -> vector<8x378xf32>
    %70 = arith.addf %63, %69 : vector<8x378xf32>
    %c0_70 = arith.constant 0 : index
    %c24 = arith.constant 24 : index
    %71 = vector.load %arg9[%c0_70, %c24] : memref<8x408xf32, #tpu.memory_space<vmem>>, vector<8x378xf32>
    tpu.vector_store %arg9[%c0_70, %c24], %43 {strides = array<i32>} : memref<8x408xf32, #tpu.memory_space<vmem>>, vector<8x378xf32>,
    %c0_71 = arith.constant 0 : index
    %c0_72 = arith.constant 0 : index
    %72 = vector.load %arg9[%c0_71, %c0_72] : memref<8x408xf32, #tpu.memory_space<vmem>>, vector<8x378xf32>
    %c0_73 = arith.constant 0 : index
    %c384 = arith.constant 384 : index
    %73 = vector.load %arg9[%c0_73, %c384] : memref<8x408xf32, #tpu.memory_space<vmem>>, vector<8x24xf32>
    %c0_74 = arith.constant 0 : index
    %c0_75 = arith.constant 0 : index
    %74 = vector.load %arg9[%c0_74, %c0_75] : memref<8x408xf32, #tpu.memory_space<vmem>>, vector<8x24xf32>
    tpu.vector_store %arg9[%c0_74, %c0_75], %73 {strides = array<i32>} : memref<8x408xf32, #tpu.memory_space<vmem>>, vector<8x24xf32>,
    %c0_76 = arith.constant 0 : index
    %c0_77 = arith.constant 0 : index
    %75 = vector.load %arg6[%c0_76, %c0_77] : memref<8x8xf32, #tpu.memory_space<vmem>>, vector<8x8xf32>
    %cst_78 = arith.constant dense<0.000000e+00> : vector<8x378xf32>
    %76 = tpu.matmul %75, %72, %cst_78 {dimension_numbers = #tpu.dot_dimension_numbers<[1], [0], [0], [1], [0, 0, 1, 1], [], []>} : vector<8x8xf32>, vector<8x378xf32>, vector<8x378xf32> -> vector<8x378xf32>
    %77 = arith.addf %70, %76 : vector<8x378xf32>
    %78 = vector.extract_strided_slice %43 {offsets = [0, 0], sizes = [4, 378], strides = [1, 1]} : vector<8x378xf32> to vector<4x378xf32>
    %79 = math.tanh %78 : vector<4x378xf32>
    %80 = vector.extract_strided_slice %43 {offsets = [4, 0], sizes = [4, 378], strides = [1, 1]} : vector<8x378xf32> to vector<4x378xf32>
    %81 = arith.negf %80 : vector<4x378xf32>
    %82 = math.exp %81 : vector<4x378xf32>
    %cst_79 = arith.constant 1.000000e+00 : f32
    %83 = vector.broadcast %cst_79 : f32 to vector<4x378xf32>
    %84 = arith.addf %83, %82 : vector<4x378xf32>
    %85 = arith.divf %83, %84 : vector<4x378xf32>
    %86 = arith.mulf %79, %85 : vector<4x378xf32>
    %87 = vector.extract_strided_slice %77 {offsets = [0, 0], sizes = [4, 378], strides = [1, 1]} : vector<8x378xf32> to vector<4x378xf32>
    %88 = math.tanh %87 : vector<4x378xf32>
    %89 = vector.extract_strided_slice %77 {offsets = [4, 0], sizes = [4, 378], strides = [1, 1]} : vector<8x378xf32> to vector<4x378xf32>
    %90 = arith.negf %89 : vector<4x378xf32>
    %91 = math.exp %90 : vector<4x378xf32>
    %cst_80 = arith.constant 1.000000e+00 : f32
    %92 = vector.broadcast %cst_80 : f32 to vector<4x378xf32>
    %93 = arith.addf %92, %91 : vector<4x378xf32>
    %94 = arith.divf %92, %93 : vector<4x378xf32>
    %95 = arith.mulf %88, %94 : vector<4x378xf32>
    %c0_81 = arith.constant 0 : index
    %c0_82 = arith.constant 0 : index
    %96 = vector.load %arg7[%c0_81, %c0_82] : memref<4x4xf32, #tpu.memory_space<vmem>>, vector<4x4xf32>
    %cst_83 = arith.constant dense<0.000000e+00> : vector<4x378xf32>
    %97 = tpu.matmul %96, %95, %cst_83 {dimension_numbers = #tpu.dot_dimension_numbers<[1], [0], [0], [1], [0, 0, 1, 1], [], []>} : vector<4x4xf32>, vector<4x378xf32>, vector<4x378xf32> -> vector<4x378xf32>
    %98 = arith.addf %65, %97 : vector<4x378xf32>
    %c0_84 = arith.constant 0 : index
    %c0_85 = arith.constant 0 : index
    %c0_86 = arith.constant 0 : index
    %99 = vector.load %arg8[%c0_84, %c0_85, %c0_86] : memref<1x8x384xf32, #tpu.memory_space<vmem>>, vector<1x4x378xf32>
    %100 = vector.shape_cast %99 : vector<1x4x378xf32> to vector<4x378xf32>
    %101 = vector.shape_cast %86 : vector<4x378xf32> to vector<1x4x378xf32>
    tpu.vector_store %arg8[%c0_84, %c0_85, %c0_86], %101 {strides = array<i32>} : memref<1x8x384xf32, #tpu.memory_space<vmem>>, vector<1x4x378xf32>,
    %c0_87 = arith.constant 0 : index
    %c4_88 = arith.constant 4 : index
    %c0_89 = arith.constant 0 : index
    %102 = vector.load %arg8[%c0_87, %c4_88, %c0_89] : memref<1x8x384xf32, #tpu.memory_space<vmem>>, vector<1x4x378xf32>
    %103 = vector.shape_cast %102 : vector<1x4x378xf32> to vector<4x378xf32>
    %104 = vector.shape_cast %98 : vector<4x378xf32> to vector<1x4x378xf32>
    tpu.vector_store %arg8[%c0_87, %c4_88, %c0_89], %104 {strides = array<i32>} : memref<1x8x384xf32, #tpu.memory_space<vmem>>, vector<1x4x378xf32>,
    return
  }
  func.func @transform_0(%arg0: i32, %arg1: i32) -> (i32, i32, i32) {
    %c0_i32 = arith.constant 0 : i32
    %c0_i32_0 = arith.constant 0 : i32
    return %arg0, %c0_i32, %arg1 : i32, i32, i32
  }
  func.func @transform_1(%arg0: i32, %arg1: i32) -> (i32, i32, i32) {
    %c0_i32 = arith.constant 0 : i32
    %c0_i32_0 = arith.constant 0 : i32
    return %arg0, %c0_i32, %arg1 : i32, i32, i32
  }
  func.func @transform_2(%arg0: i32, %arg1: i32) -> (i32, i32, i32) {
    %c0_i32 = arith.constant 0 : i32
    %c0_i32_0 = arith.constant 0 : i32
    %c0_i32_1 = arith.constant 0 : i32
    %c0_i32_2 = arith.constant 0 : i32
    return %c0_i32, %c0_i32_0, %c0_i32_1 : i32, i32, i32
  }
  func.func @transform_3(%arg0: i32, %arg1: i32) -> (i32, i32, i32) {
    %c0_i32 = arith.constant 0 : i32
    %c0_i32_0 = arith.constant 0 : i32
    %c0_i32_1 = arith.constant 0 : i32
    %c0_i32_2 = arith.constant 0 : i32
    return %c0_i32, %c0_i32_0, %c0_i32_1 : i32, i32, i32
  }
  func.func @transform_4(%arg0: i32, %arg1: i32) -> (i32, i32) {
    %c0_i32 = arith.constant 0 : i32
    %c0_i32_0 = arith.constant 0 : i32
    %c0_i32_1 = arith.constant 0 : i32
    return %c0_i32, %c0_i32_0 : i32, i32
  }
  func.func @transform_5(%arg0: i32, %arg1: i32) -> (i32, i32) {
    %c0_i32 = arith.constant 0 : i32
    %c0_i32_0 = arith.constant 0 : i32
    %c0_i32_1 = arith.constant 0 : i32
    return %c0_i32, %c0_i32_0 : i32, i32
  }
  func.func @transform_6(%arg0: i32, %arg1: i32) -> (i32, i32, i32) {
    %c0_i32 = arith.constant 0 : i32
    %c0_i32_0 = arith.constant 0 : i32
    return %arg0, %c0_i32, %arg1 : i32, i32, i32
  }
}

</mosaic_0001>

<llo_original>
// kernel: tpu_custom_call.1
$region0: #{tpu_custom_call.1}
  #allocation0 [shape = 'u32[]', space=smem, size = 0x4, offset = 0x4, fixed_abs, tag = 'smem constant byte address 0x4 - core index']
  #allocation1 [shape = 'u32[72,128]{1,0:T(1,128)}', space=vmem, size = 0x9000, scoped, tag = 'internal scratch']
  #allocation2 [shape = 'f32[8,408]{1,0:T(8,128)}', space=vmem, size = 0x4000, scoped, tag = 'scratch operand']
  %s0 = inlined_call_operand.hbm [shape: bf16[2,16,384], index: 0, kind: input, shape index: {}]
  %s1 = inlined_call_operand.vmem [shape: f32[2,4,384], index: 1, kind: input, shape index: {}]
  %s2 = inlined_call_operand.hbm [shape: bf16[7,8,16], index: 2, kind: input, shape index: {}]
  %s3 = inlined_call_operand.vmem [shape: bf16[4,8,4], index: 3, kind: input, shape index: {}]
  %s4 = inlined_call_operand.hbm [shape: f32[8,8], index: 4, kind: input, shape index: {}]
  %s5 = inlined_call_operand.vmem [shape: f32[4,4], index: 5, kind: input, shape index: {}]
  %s6 = inlined_call_operand.hbm [shape: f32[2,8,384], index: 6, kind: output, shape index: {}]
  %s7 = sld [smem:[#allocation0]]
  $region73: #{tpu_custom_call.1} parent=0
    _
  %s9 = ssub.s32 1, %s7
  %s10 = scalar_select 0, %s9, %s7
  $region1: #{tpu_custom_call.1} parent=0
    #allocation3 [shape = 'u8[24576]{0}', space=vmem, size = 0x6000, scoped, tag = 'input window, operand 0']
    #allocation4 [shape = 's32[2]{0}', space=sflag, size = 0x8, scoped, tag = 'scoped memory for tpu_custom_call.1']
    #allocation5 [shape = 's32[2]{0}', space=sflag, size = 0x8, scoped, tag = 'scoped memory for tpu_custom_call.1']
    #allocation6 [shape = 'u8[14336]{0}', space=vmem, size = 0x3800, scoped, tag = 'input window, operand 2, single buffered']
    #allocation7 [shape = 's32[1]{0}', space=sflag, size = 0x4, scoped, tag = 'scoped memory for tpu_custom_call.1']
    #allocation8 [shape = 'u8[4096]{0}', space=vmem, size = 0x1000, scoped, tag = 'input window, operand 4, single buffered']
    #allocation9 [shape = 'u8[24576]{0}', space=vmem, size = 0x6000, scoped, tag = 'output window, operand 0']
    %11 = vsyncpa [#allocation4], 0
    %s12 = scalar_lea.sflag [#allocation4], 1
    %13 = vsyncpa %s12, 0
    %14 = vsyncpa [#allocation7], 0
    %15 = vsyncpa [#allocation5], 0
    %s16 = scalar_lea.sflag [#allocation5], 1
    %17 = vsyncpa %s16, 0
    loop: start=0, step=1, limit=4
    $region2: #{tpu_custom_call.1} parent=1 // loop_pre_header
      _
    $region3: #{tpu_custom_call.1} parent=1 // loop_header
      %s19 = sphi 0, %s23
      %p20 = scmp.ge.s32.totalorder %s19, 4
      %s26 = sphi 0, %s38
      %s27 = sphi 0, %s34
      %s28 = sphi 0, %s26
      %s29 = sphi 0, %s27
      %s30 = sphi 0, %s28
      %s31 = sphi 0, %s29
      %s43 = sphi 0, %s45
      %s46 = sphi 0, %s43
      %s47 = sphi 0, %s46
      %s63 = sphi 0, %s47
      %s71 = sphi 0, %s73
      %s74 = sphi 0, %s71
      %s75 = sphi 0, %s74
      %s91 = sphi 0, %s75
      %s95 = sphi 0, %s95
      %s97 = sphi 0, %s95
      %s98 = sphi 0, %s97
      %s112 = sphi 0, %s98
      %s116 = sphi 0, %s116
      %s118 = sphi 0, %s116
      %s119 = sphi 0, %s118
      %s133 = sphi 0, %s119
      %s137 = sphi 0, %s137
      %s139 = sphi 0, %s137
      %s140 = sphi 0, %s139
      %s154 = sphi 0, %s140
      %s158 = sphi 0, %s158
      %s160 = sphi 0, %s158
      %s161 = sphi 0, %s160
      %s175 = sphi 0, %s161
      %s183 = sphi 0, %s185
      %s186 = sphi 0, %s183
      %s187 = sphi 0, %s186
      %s203 = sphi 0, %s187
    $region4: #{tpu_custom_call.1} parent=1 // loop_header_branch
      %22 = sbr.rel (%p20) target = $region8
    $region5: #{tpu_custom_call.1} parent=1 // loop_body
      %s24 = ssub.s32 %s19, 1
      %s25 = ssub.s32 %s19, 2
      %s32 = sadd.s32 1, %s27
      %p33 = scmp.ge.s32.totalorder %s32, 1
      %s34 = scalar_select %p33, 0, %s32
      %s35 = sadd.s32 1, %s26
      %s36 = scalar_select %p33, %s35, %s26
      %p37 = scmp.ge.s32.totalorder %s36, 2
      %s38 = scalar_select %p37, 0, %s36
      %s39 = ssub.s32 %s26, %s38
      %s40 = ssub.s32 %s27, %s34
      %s41 = sor.u32 %s39, %s40
      %p42 = scmp.eq.s32.totalorder %s41, 0
      %s44 = sadd.s32 %s43, 1
      %s45 = scalar_select %p42, %s43, %s44
      %p48 = pneg %p42
      %p49 = scmp.eq.s32.totalorder %s19, 1
      %p50 = por %p48, %p49
      %p51 = scmp.ne.s32.totalorder %s43, %s46
      %p52 = scmp.eq.s32.totalorder %s19, 0
      %p53 = por %p51, %p52
      %p54 = scmp.ne.s32.totalorder %s43, %s46
      %p55 = scmp.eq.s32.totalorder %s24, 1
      %p56 = por %p54, %p55
      %p57 = scmp.ne.s32.totalorder %s46, %s47
      %p58 = scmp.eq.s32.totalorder %s24, 0
      %p59 = por %p57, %p58
      %p60 = scmp.ne.s32.totalorder %s46, %s47
      %p61 = scmp.eq.s32.totalorder %s25, 1
      %p62 = por %p60, %p61
      %p64 = scmp.ne.s32.totalorder %s47, %s63
      %p65 = scmp.eq.s32.totalorder %s25, 0
      %p66 = por %p64, %p65
      %s67 = ssub.s32 %s26, %s38
      %s68 = ssub.s32 %s27, %s34
      %s69 = sor.u32 %s67, %s68
      %p70 = scmp.eq.s32.totalorder %s69, 0
      %s72 = sadd.s32 %s71, 1
      %s73 = scalar_select %p70, %s71, %s72
      %p76 = pneg %p70
      %p77 = scmp.eq.s32.totalorder %s19, 1
      %p78 = por %p76, %p77
      %p79 = scmp.ne.s32.totalorder %s71, %s74
      %p80 = scmp.eq.s32.totalorder %s19, 0
      %p81 = por %p79, %p80
      %p82 = scmp.ne.s32.totalorder %s71, %s74
      %p83 = scmp.eq.s32.totalorder %s24, 1
      %p84 = por %p82, %p83
      %p85 = scmp.ne.s32.totalorder %s74, %s75
      %p86 = scmp.eq.s32.totalorder %s24, 0
      %p87 = por %p85, %p86
      %p88 = scmp.ne.s32.totalorder %s74, %s75
      %p89 = scmp.eq.s32.totalorder %s25, 1
      %p90 = por %p88, %p89
      %p92 = scmp.ne.s32.totalorder %s75, %s91
      %p93 = scmp.eq.s32.totalorder %s25, 0
      %p94 = por %p92, %p93
      %s96 = sadd.s32 %s95, 1
      %p99 = scmp.eq.s32.totalorder %s19, 1
      %p100 = scmp.ne.s32.totalorder %s95, %s97
      %p101 = scmp.eq.s32.totalorder %s19, 0
      %p102 = por %p100, %p101
      %p103 = scmp.ne.s32.totalorder %s95, %s97
      %p104 = scmp.eq.s32.totalorder %s24, 1
      %p105 = por %p103, %p104
      %p106 = scmp.ne.s32.totalorder %s97, %s98
      %p107 = scmp.eq.s32.totalorder %s24, 0
      %p108 = por %p106, %p107
      %p109 = scmp.ne.s32.totalorder %s97, %s98
      %p110 = scmp.eq.s32.totalorder %s25, 1
      %p111 = por %p109, %p110
      %p113 = scmp.ne.s32.totalorder %s98, %s112
      %p114 = scmp.eq.s32.totalorder %s25, 0
      %p115 = por %p113, %p114
      %s117 = sadd.s32 %s116, 1
      %p120 = scmp.eq.s32.totalorder %s19, 1
      %p121 = scmp.ne.s32.totalorder %s116, %s118
      %p122 = scmp.eq.s32.totalorder %s19, 0
      %p123 = por %p121, %p122
      %p124 = scmp.ne.s32.totalorder %s116, %s118
      %p125 = scmp.eq.s32.totalorder %s24, 1
      %p126 = por %p124, %p125
      %p127 = scmp.ne.s32.totalorder %s118, %s119
      %p128 = scmp.eq.s32.totalorder %s24, 0
      %p129 = por %p127, %p128
      %p130 = scmp.ne.s32.totalorder %s118, %s119
      %p131 = scmp.eq.s32.totalorder %s25, 1
      %p132 = por %p130, %p131
      %p134 = scmp.ne.s32.totalorder %s119, %s133
      %p135 = scmp.eq.s32.totalorder %s25, 0
      %p136 = por %p134, %p135
      %s138 = sadd.s32 %s137, 1
      %p141 = scmp.eq.s32.totalorder %s19, 1
      %p142 = scmp.ne.s32.totalorder %s137, %s139
      %p143 = scmp.eq.s32.totalorder %s19, 0
      %p144 = por %p142, %p143
      %p145 = scmp.ne.s32.totalorder %s137, %s139
      %p146 = scmp.eq.s32.totalorder %s24, 1
      %p147 = por %p145, %p146
      %p148 = scmp.ne.s32.totalorder %s139, %s140
      %p149 = scmp.eq.s32.totalorder %s24, 0
      %p150 = por %p148, %p149
      %p151 = scmp.ne.s32.totalorder %s139, %s140
      %p152 = scmp.eq.s32.totalorder %s25, 1
      %p153 = por %p151, %p152
      %p155 = scmp.ne.s32.totalorder %s140, %s154
      %p156 = scmp.eq.s32.totalorder %s25, 0
      %p157 = por %p155, %p156
      %s159 = sadd.s32 %s158, 1
      %p162 = scmp.eq.s32.totalorder %s19, 1
      %p163 = scmp.ne.s32.totalorder %s158, %s160
      %p164 = scmp.eq.s32.totalorder %s19, 0
      %p165 = por %p163, %p164
      %p166 = scmp.ne.s32.totalorder %s158, %s160
      %p167 = scmp.eq.s32.totalorder %s24, 1
      %p168 = por %p166, %p167
      %p169 = scmp.ne.s32.totalorder %s160, %s161
      %p170 = scmp.eq.s32.totalorder %s24, 0
      %p171 = por %p169, %p170
      %p172 = scmp.ne.s32.totalorder %s160, %s161
      %p173 = scmp.eq.s32.totalorder %s25, 1
      %p174 = por %p172, %p173
      %p176 = scmp.ne.s32.totalorder %s161, %s175
      %p177 = scmp.eq.s32.totalorder %s25, 0
      %p178 = por %p176, %p177
      %s179 = ssub.s32 %s26, %s38
      %s180 = ssub.s32 %s27, %s34
      %s181 = sor.u32 %s179, %s180
      %p182 = scmp.eq.s32.totalorder %s181, 0
      %s184 = sadd.s32 %s183, 1
      %s185 = scalar_select %p182, %s183, %s184
      %p188 = pneg %p182
      %p189 = scmp.eq.s32.totalorder %s19, 1
      %p190 = por %p188, %p189
      %p191 = scmp.ne.s32.totalorder %s183, %s186
      %p192 = scmp.eq.s32.totalorder %s19, 0
      %p193 = por %p191, %p192
      %p194 = scmp.ne.s32.totalorder %s183, %s186
      %p195 = scmp.eq.s32.totalorder %s24, 1
      %p196 = por %p194, %p195
      %p197 = scmp.ne.s32.totalorder %s186, %s187
      %p198 = scmp.eq.s32.totalorder %s24, 0
      %p199 = por %p197, %p198
      %p200 = scmp.ne.s32.totalorder %s186, %s187
      %p201 = scmp.eq.s32.totalorder %s25, 1
      %p202 = por %p200, %p201
      %p204 = scmp.ne.s32.totalorder %s187, %s203
      %p205 = scmp.eq.s32.totalorder %s25, 0
      %p206 = por %p204, %p205
      %p207 = scmp.le.s32.totalorder 1, %s19
      %p208 = scmp.lt.s32.totalorder %s19, 3
      %p209 = pnand %p207, %p208
      %p210 = pneg %p209
      // Predicated region
      $region9: #{tpu_custom_call.1} parent=5 // pred_check
        _
      $region10: #{tpu_custom_call.1} parent=5 // pred_check_branch
        %212 = sbr.rel (%p209) target = $region12
      $region11: #{tpu_custom_call.1} parent=5 // pred_region
        %s213 = ssub.s32 %s19, 1
        // Predicated region
        $region13: #{tpu_custom_call.1} parent=11 // pred_check
          %p214 = pneg %p108
        $region14: #{tpu_custom_call.1} parent=11 // pred_check_branch
          %216 = sbr.rel (%p214) target = $region16
        $region15: #{tpu_custom_call.1} parent=11 // pred_region
          %218 = vsyncadd [#allocation7], 0
          %s219 = sshll.u32 %s2, 4
          %s220 = int_to_ptr.hbm [resolvable:$true] %s219
          %s221 = sshll.u32 [#allocation6], 4
          %s222 = int_to_ptr.vmem [resolvable:$true] %s221
          %227 = dma.hbm_to_vmem [thread:$0]  %s220, 448, %s222, [#allocation7], 64, 64, 4
        $region16: #{tpu_custom_call.1} parent=11 // pred_fallthru
          _
        // Predicated region
        $region17: #{tpu_custom_call.1} parent=11 // pred_check
          %p228 = pneg %p129
        $region18: #{tpu_custom_call.1} parent=11 // pred_check_branch
          %230 = sbr.rel (%p228) target = $region20
        $region19: #{tpu_custom_call.1} parent=11 // pred_region
          _
        $region20: #{tpu_custom_call.1} parent=11 // pred_fallthru
          _
        // Predicated region
        $region21: #{tpu_custom_call.1} parent=11 // pred_check
          %p231 = pneg %p150
        $region22: #{tpu_custom_call.1} parent=11 // pred_check_branch
          %233 = sbr.rel (%p231) target = $region24
        $region23: #{tpu_custom_call.1} parent=11 // pred_region
          %235 = vsyncadd [#allocation7], 0
          %s237 = sshll.u32 %s4, 4
          %s238 = int_to_ptr.hbm [resolvable:$true] %s237
          %s239 = sshll.u32 [#allocation8], 4
          %s240 = int_to_ptr.vmem [resolvable:$true] %s239
          %242 = dma.hbm_to_vmem [thread:$0]  %s238, 128, %s240, [#allocation7]
        $region24: #{tpu_custom_call.1} parent=11 // pred_fallthru
          _
        // Predicated region
        $region25: #{tpu_custom_call.1} parent=11 // pred_check
          %p243 = pneg %p171
        $region26: #{tpu_custom_call.1} parent=11 // pred_check_branch
          %245 = sbr.rel (%p243) target = $region28
        $region27: #{tpu_custom_call.1} parent=11 // pred_region
          _
        $region28: #{tpu_custom_call.1} parent=11 // pred_fallthru
          _
      $region12: #{tpu_custom_call.1} parent=5 // pred_fallthru
        _
      %p246 = scmp.lt.s32.totalorder %s19, 2
      // Predicated region
      $region29: #{tpu_custom_call.1} parent=5 // pred_check
        %p247 = pneg %p246
      $region30: #{tpu_custom_call.1} parent=5 // pred_check_branch
        %249 = sbr.rel (%p247) target = $region32
      $region31: #{tpu_custom_call.1} parent=5 // pred_region
        // Predicated region
        $region33: #{tpu_custom_call.1} parent=31 // pred_check
          %p250 = pneg %p53
        $region34: #{tpu_custom_call.1} parent=31 // pred_check_branch
          %252 = sbr.rel (%p250) target = $region36
        $region35: #{tpu_custom_call.1} parent=31 // pred_region
          %s253 = sand.u32 %s43, 1
          %s254 = scalar_lea.sflag [#allocation4], %s253
          %s255 = sand.u32 %s43, 1
          %s256 = smul.addr %s255, 24
          %s257 = scalar_lea.vmem [#allocation3], %s256
          %s258 = smul.u32 3, %s27
          %260 = vsyncadd %s254, 0
          %s261 = smul.addr %s26, 6
          %s262 = sadd.s32 %s258, %s261
          %s263 = smul.addr %s262, 4
          %s264 = scalar_lea.hbm %s0, %s263
          %s265 = sshll.u32 %s264, 4
          %s266 = int_to_ptr.hbm [resolvable:$true] %s265
          %s267 = sshll.u32 %s257, 4
          %s268 = int_to_ptr.vmem [resolvable:$true] %s267
          %273 = dma.hbm_to_vmem [thread:$0]  %s266, 384, %s268, %s254, 192, 192, 12
        $region36: #{tpu_custom_call.1} parent=31 // pred_fallthru
          _
        // Predicated region
        $region37: #{tpu_custom_call.1} parent=31 // pred_check
          %p274 = pneg %p81
        $region38: #{tpu_custom_call.1} parent=31 // pred_check_branch
          %276 = sbr.rel (%p274) target = $region40
        $region39: #{tpu_custom_call.1} parent=31 // pred_region
          %s277 = smul.u32 3, %s27
          %p278 = scmp.lt.s32.totalorder %s26, 1
          %s279 = scalar_select %p278, %s26, 1
          %p280 = scmp.lt.s32.totalorder %s277, 2
          %s281 = scalar_select %p280, %s277, 2
          %s282 = smul.addr %s279, 3
          %s283 = sadd.s32 %s281, %s282
          %s284 = smul.addr %s283, 4
          %s285 = scalar_lea.vmem %s1, %s284
          %s286 = smul.u32 3, %s27
        $region40: #{tpu_custom_call.1} parent=31 // pred_fallthru
          _
      $region32: #{tpu_custom_call.1} parent=5 // pred_fallthru
        _
      %p287 = scmp.le.s32.totalorder 1, %s19
      %p288 = scmp.lt.s32.totalorder %s19, 3
      %p289 = pnand %p287, %p288
      %p290 = pneg %p289
      // Predicated region
      $region41: #{tpu_custom_call.1} parent=5 // pred_check
        _
      $region42: #{tpu_custom_call.1} parent=5 // pred_check_branch
        %292 = sbr.rel (%p289) target = $region44
      $region43: #{tpu_custom_call.1} parent=5 // pred_region
        %s293 = ssub.s32 %s19, 1
        %s294 = sand.u32 %s46, 1
        %s295 = scalar_lea.sflag [#allocation4], %s294
        %s296 = sand.u32 %s46, 1
        %s297 = smul.addr %s296, 24
        %s298 = scalar_lea.vmem [#allocation3], %s297
        // Predicated region
        $region45: #{tpu_custom_call.1} parent=43 // pred_check
          %p299 = pneg %p59
        $region46: #{tpu_custom_call.1} parent=43 // pred_check_branch
          %301 = sbr.rel (%p299) target = $region48
        $region47: #{tpu_custom_call.1} parent=43 // pred_region
          %303 = dma.done %s295, 384
        $region48: #{tpu_custom_call.1} parent=43 // pred_fallthru
          _
        // Predicated region
        $region49: #{tpu_custom_call.1} parent=43 // pred_check
          %p304 = pneg %p108
        $region50: #{tpu_custom_call.1} parent=43 // pred_check_branch
          %306 = sbr.rel (%p304) target = $region52
        $region51: #{tpu_custom_call.1} parent=43 // pred_region
          %308 = dma.done [#allocation7], 448
        $region52: #{tpu_custom_call.1} parent=43 // pred_fallthru
          _
        // Predicated region
        $region53: #{tpu_custom_call.1} parent=43 // pred_check
          %p309 = pneg %p150
        $region54: #{tpu_custom_call.1} parent=43 // pred_check_branch
          %311 = sbr.rel (%p309) target = $region56
        $region55: #{tpu_custom_call.1} parent=43 // pred_region
          %313 = dma.done [#allocation7], 128
        $region56: #{tpu_custom_call.1} parent=43 // pred_fallthru
          _
        %s314 = sand.u32 %s46, 1
        %s315 = scalar_lea.sflag [#allocation4], %s314
        %s316 = sand.u32 %s46, 1
        %s317 = smul.addr %s316, 24
        %s318 = scalar_lea.vmem [#allocation3], %s317
        %p319 = pneg %p59
        %p320 = pneg %p56
        %s321 = smul.u32 3, %s29
        %p322 = scmp.lt.s32.totalorder %s28, 1
        %s323 = scalar_select %p322, %s28, 1
        %p324 = scmp.lt.s32.totalorder %s321, 2
        %s325 = scalar_select %p324, %s321, 2
        %s326 = smul.addr %s323, 3
        %s327 = sadd.s32 %s325, %s326
        %s328 = smul.addr %s327, 4
        %s329 = scalar_lea.vmem %s1, %s328
        %p330 = pneg %p87
        %p331 = pneg %p84
        %p332 = pneg %p108
        %p333 = pneg %p105
        %p334 = pneg %p129
        %p335 = pneg %p126
        %p336 = pneg %p150
        %p337 = pneg %p147
        %p338 = pneg %p171
        %p339 = pneg %p168
        %p340 = pneg %p199
        %p341 = pneg %p196
        %s342 = sand.u32 %s186, 1
        %s343 = scalar_lea.sflag [#allocation5], %s342
        %s344 = sand.u32 %s186, 1
        %s345 = smul.addr %s344, 24
        %s346 = scalar_lea.vmem [#allocation9], %s345
        %s347 = smul.u32 3, %s29
        %s348 = smul.u32 3, %s29
        %p349 = scmp.lt.s32.totalorder %s28, 1
        %s350 = scalar_select %p349, %s28, 1
        %p351 = scmp.lt.s32.totalorder %s348, 2
        %s352 = scalar_select %p351, %s348, 2
        %s353 = smul.addr %s350, 3
        %s354 = sadd.s32 %s352, %s353
        %s355 = smul.addr %s354, 4
        %s356 = scalar_lea.vmem %s1, %s355
        %s357 = smul.u32 3, %s29
        %s358 = smul.u32 3, %s29
        %p360 = scmp.eq.s32.totalorder %s29, 0
        // Predicated region
        $region57: #{tpu_custom_call.1} parent=43 // pred_check
          %p361 = pneg %p360
        $region58: #{tpu_custom_call.1} parent=43 // pred_check_branch
          %363 = sbr.rel (%p361) target = $region60
        $region59: #{tpu_custom_call.1} parent=43 // pred_region
          %364 = vst [vmem:[#allocation2] sm:$0xff] 0.0
          %365 = vst [vmem:[#allocation2 + $0x8] sm:$0xff] 0.0
          %366 = vst [vmem:[#allocation2 + $0x10] sm:$0xff] 0.0
          %vm367 = vcmask 195584
          %368 = vst.msk [vmem:[#allocation2 + $0x18] sm:$0xff] %vm367, 0.0
        $region60: #{tpu_custom_call.1} parent=43 // pred_fallthru
          _
        %v369 = vld [vmem:[#allocation6] sm:$0xf]
        %v370 = vld [vmem:[%s298] sm:$0xff]
        %v371 = vld [vmem:[%s298 + $0x8] sm:$0xf]
        %v372 = vld [vmem:[%s298 + $0xc] sm:$0xff]
        %v373 = vld [vmem:[%s298 + $0x14] sm:$0xf]
        %s374 = scalar_lea.vmem [#allocation6], 4
        %v375 = vld [vmem:[%s374] sm:$0xf]
        %v380 = vunpack.c.l.b16 %v370
        %v381 = vunpack.c.h.b16 %v370
        %v382 = vunpack.c.l.b16 %v371
        %v383 = vunpack.c.l.b16 %v372
        %v384 = vunpack.c.h.b16 %v372
        %v385 = vunpack.c.l.b16 %v373
        %v386 = vpack.c.b16 %v383, %v380
        %v387 = vpack.c.b16 %v384, %v381
        %v388 = vpack.c.b16 %v385, %v382
        %389 = vrot.lane.b32.xlu0 %v386, 127
        %v390 = vpop.permute.xlu0 %389
        %391 = vrot.lane.b32.xlu0 %v387, 127
        %v392 = vpop.permute.xlu0 %391
        %393 = vrot.lane.b32.xlu0 %v388, 127
        %v394 = vpop.permute.xlu0 %393
        %vm395 = vcmask 1039360
        %v396 = vsel %vm395, %v390, %v392
        %v397 = vsel %vm395, %v392, %v394
        %vm401 = vcmask 130048
        %v403 = vsel %vm401, %v375, 0
        %405 = vmatpush.bf16.msra.mxu0 0
        %406 = vmatpush.bf16.msra.mxu0 0
        %407 = vmatpush.bf16.msra.mxu0 0
        %408 = vmatpush.bf16.msra.mxu0 0
        %409 = vmatpush.bf16.msra.mxu0 0
        %410 = vmatpush.bf16.msra.mxu0 0
        %411 = vmatpush.bf16.msra.mxu0 0
        %412 = vmatpush.bf16.msra.mxu0 %v396
        %413 = vmatmul.bf16.gmra.mxu0 %v403
        %v414 = vpop.f32.mrf.mxu0
        %v415 = vadd.f32 0.0, %v414
        %v416 = vpop.f32.mrf.mxu0
        %417 = vdwg.mxu0
        %418 = vmatpush.bf16.msra.mxu0 0
        %419 = vmatpush.bf16.msra.mxu0 0
        %420 = vmatpush.bf16.msra.mxu0 0
        %421 = vmatpush.bf16.msra.mxu0 0
        %422 = vmatpush.bf16.msra.mxu0 0
        %423 = vmatpush.bf16.msra.mxu0 0
        %424 = vmatpush.bf16.msra.mxu0 0
        %425 = vmatpush.bf16.msra.mxu0 %v397
        %426 = vmatmul.bf16.gmra.mxu0 %v403
        %v427 = vpop.f32.mrf.mxu0
        %v428 = vadd.f32 0.0, %v427
        %v429 = vpop.f32.mrf.mxu0
        %430 = vdwg.mxu0
        %431 = vmatpush.bf16.msra.mxu0 0
        %432 = vmatpush.bf16.msra.mxu0 0
        %433 = vmatpush.bf16.msra.mxu0 0
        %434 = vmatpush.bf16.msra.mxu0 0
        %435 = vmatpush.bf16.msra.mxu0 0
        %436 = vmatpush.bf16.msra.mxu0 0
        %437 = vmatpush.bf16.msra.mxu0 0
        %438 = vmatpush.bf16.msra.mxu0 %v394
        %439 = vmatmul.bf16.gmra.mxu0 %v403
        %v440 = vpop.f32.mrf.mxu0
        %v441 = vadd.f32 0.0, %v440
        %v442 = vpop.f32.mrf.mxu0
        %443 = vdwg.mxu0
        %v448 = vsel %vm401, %v369, 0
        %450 = vmatpush.bf16.msra.mxu0 0
        %451 = vmatpush.bf16.msra.mxu0 0
        %452 = vmatpush.bf16.msra.mxu0 0
        %453 = vmatpush.bf16.msra.mxu0 0
        %454 = vmatpush.bf16.msra.mxu0 0
        %455 = vmatpush.bf16.msra.mxu0 0
        %456 = vmatpush.bf16.msra.mxu0 0
        %457 = vmatpush.bf16.msra.mxu0 %v386
        %458 = vmatmul.bf16.gmra.mxu0 %v448
        %v459 = vpop.f32.mrf.mxu0
        %v460 = vadd.f32 %v415, %v459
        %v461 = vpop.f32.mrf.mxu0
        %462 = vdwg.mxu0
        %463 = vmatpush.bf16.msra.mxu0 0
        %464 = vmatpush.bf16.msra.mxu0 0
        %465 = vmatpush.bf16.msra.mxu0 0
        %466 = vmatpush.bf16.msra.mxu0 0
        %467 = vmatpush.bf16.msra.mxu0 0
        %468 = vmatpush.bf16.msra.mxu0 0
        %469 = vmatpush.bf16.msra.mxu0 0
        %470 = vmatpush.bf16.msra.mxu0 %v387
        %471 = vmatmul.bf16.gmra.mxu0 %v448
        %v472 = vpop.f32.mrf.mxu0
        %v473 = vadd.f32 %v428, %v472
        %v474 = vpop.f32.mrf.mxu0
        %475 = vdwg.mxu0
        %476 = vmatpush.bf16.msra.mxu0 0
        %477 = vmatpush.bf16.msra.mxu0 0
        %478 = vmatpush.bf16.msra.mxu0 0
        %479 = vmatpush.bf16.msra.mxu0 0
        %480 = vmatpush.bf16.msra.mxu0 0
        %481 = vmatpush.bf16.msra.mxu0 0
        %482 = vmatpush.bf16.msra.mxu0 0
        %483 = vmatpush.bf16.msra.mxu0 %v388
        %484 = vmatmul.bf16.gmra.mxu0 %v448
        %v485 = vpop.f32.mrf.mxu0
        %v486 = vadd.f32 %v441, %v485
        %v487 = vpop.f32.mrf.mxu0
        %488 = vdwg.mxu0
        %s489 = scalar_lea.vmem [#allocation6], 8
        %v490 = vld [vmem:[%s489] sm:$0xf]
        %491 = vrot.lane.b32.xlu0 %v386, 126
        %v492 = vpop.permute.xlu0 %491
        %493 = vrot.lane.b32.xlu0 %v387, 126
        %v494 = vpop.permute.xlu0 %493
        %495 = vrot.lane.b32.xlu0 %v388, 126
        %v496 = vpop.permute.xlu0 %495
        %vm497 = vcmask 1031168
        %v498 = vsel %vm497, %v492, %v494
        %v499 = vsel %vm497, %v494, %v496
        %v504 = vsel %vm401, %v490, 0
        %506 = vmatpush.bf16.msra.mxu0 0
        %507 = vmatpush.bf16.msra.mxu0 0
        %508 = vmatpush.bf16.msra.mxu0 0
        %509 = vmatpush.bf16.msra.mxu0 0
        %510 = vmatpush.bf16.msra.mxu0 0
        %511 = vmatpush.bf16.msra.mxu0 0
        %512 = vmatpush.bf16.msra.mxu0 0
        %513 = vmatpush.bf16.msra.mxu0 %v498
        %514 = vmatmul.bf16.gmra.mxu0 %v504
        %v515 = vpop.f32.mrf.mxu0
        %v516 = vadd.f32 0.0, %v515
        %v517 = vpop.f32.mrf.mxu0
        %518 = vdwg.mxu0
        %519 = vmatpush.bf16.msra.mxu0 0
        %520 = vmatpush.bf16.msra.mxu0 0
        %521 = vmatpush.bf16.msra.mxu0 0
        %522 = vmatpush.bf16.msra.mxu0 0
        %523 = vmatpush.bf16.msra.mxu0 0
        %524 = vmatpush.bf16.msra.mxu0 0
        %525 = vmatpush.bf16.msra.mxu0 0
        %526 = vmatpush.bf16.msra.mxu0 %v499
        %527 = vmatmul.bf16.gmra.mxu0 %v504
        %v528 = vpop.f32.mrf.mxu0
        %v529 = vadd.f32 0.0, %v528
        %v530 = vpop.f32.mrf.mxu0
        %531 = vdwg.mxu0
        %532 = vmatpush.bf16.msra.mxu0 0
        %533 = vmatpush.bf16.msra.mxu0 0
        %534 = vmatpush.bf16.msra.mxu0 0
        %535 = vmatpush.bf16.msra.mxu0 0
        %536 = vmatpush.bf16.msra.mxu0 0
        %537 = vmatpush.bf16.msra.mxu0 0
        %538 = vmatpush.bf16.msra.mxu0 0
        %539 = vmatpush.bf16.msra.mxu0 %v496
        %540 = vmatmul.bf16.gmra.mxu0 %v504
        %v541 = vpop.f32.mrf.mxu0
        %v542 = vadd.f32 0.0, %v541
        %v543 = vpop.f32.mrf.mxu0
        %544 = vdwg.mxu0
        %v545 = vadd.f32 %v460, %v516
        %v546 = vadd.f32 %v473, %v529
        %v547 = vadd.f32 %v486, %v542
        %s548 = scalar_lea.vmem [#allocation6], 12
        %v549 = vld [vmem:[%s548] sm:$0xf]
        %550 = vrot.lane.b32.xlu0 %v386, 125
        %v551 = vpop.permute.xlu0 %550
        %552 = vrot.lane.b32.xlu0 %v387, 125
        %v553 = vpop.permute.xlu0 %552
        %554 = vrot.lane.b32.xlu0 %v388, 125
        %v555 = vpop.permute.xlu0 %554
        %vm556 = vcmask 1022976
        %v557 = vsel %vm556, %v551, %v553
        %v558 = vsel %vm556, %v553, %v555
        %v563 = vsel %vm401, %v549, 0
        %565 = vmatpush.bf16.msra.mxu0 0
        %566 = vmatpush.bf16.msra.mxu0 0
        %567 = vmatpush.bf16.msra.mxu0 0
        %568 = vmatpush.bf16.msra.mxu0 0
        %569 = vmatpush.bf16.msra.mxu0 0
        %570 = vmatpush.bf16.msra.mxu0 0
        %571 = vmatpush.bf16.msra.mxu0 0
        %572 = vmatpush.bf16.msra.mxu0 %v557
        %573 = vmatmul.bf16.gmra.mxu0 %v563
        %v574 = vpop.f32.mrf.mxu0
        %v575 = vadd.f32 0.0, %v574
        %v576 = vpop.f32.mrf.mxu0
        %577 = vdwg.mxu0
        %578 = vmatpush.bf16.msra.mxu0 0
        %579 = vmatpush.bf16.msra.mxu0 0
        %580 = vmatpush.bf16.msra.mxu0 0
        %581 = vmatpush.bf16.msra.mxu0 0
        %582 = vmatpush.bf16.msra.mxu0 0
        %583 = vmatpush.bf16.msra.mxu0 0
        %584 = vmatpush.bf16.msra.mxu0 0
        %585 = vmatpush.bf16.msra.mxu0 %v558
        %586 = vmatmul.bf16.gmra.mxu0 %v563
        %v587 = vpop.f32.mrf.mxu0
        %v588 = vadd.f32 0.0, %v587
        %v589 = vpop.f32.mrf.mxu0
        %590 = vdwg.mxu0
        %591 = vmatpush.bf16.msra.mxu0 0
        %592 = vmatpush.bf16.msra.mxu0 0
        %593 = vmatpush.bf16.msra.mxu0 0
        %594 = vmatpush.bf16.msra.mxu0 0
        %595 = vmatpush.bf16.msra.mxu0 0
        %596 = vmatpush.bf16.msra.mxu0 0
        %597 = vmatpush.bf16.msra.mxu0 0
        %598 = vmatpush.bf16.msra.mxu0 %v555
        %599 = vmatmul.bf16.gmra.mxu0 %v563
        %v600 = vpop.f32.mrf.mxu0
        %v601 = vadd.f32 0.0, %v600
        %v602 = vpop.f32.mrf.mxu0
        %603 = vdwg.mxu0
        %v604 = vadd.f32 %v545, %v575
        %v605 = vadd.f32 %v546, %v588
        %v606 = vadd.f32 %v547, %v601
        %s607 = scalar_lea.vmem [#allocation6], 16
        %v608 = vld [vmem:[%s607] sm:$0xf]
        %609 = vrot.lane.b32.xlu0 %v386, 124
        %v610 = vpop.permute.xlu0 %609
        %611 = vrot.lane.b32.xlu0 %v387, 124
        %v612 = vpop.permute.xlu0 %611
        %613 = vrot.lane.b32.xlu0 %v388, 124
        %v614 = vpop.permute.xlu0 %613
        %vm615 = vcmask 1014784
        %v616 = vsel %vm615, %v610, %v612
        %v617 = vsel %vm615, %v612, %v614
        %v622 = vsel %vm401, %v608, 0
        %624 = vmatpush.bf16.msra.mxu0 0
        %625 = vmatpush.bf16.msra.mxu0 0
        %626 = vmatpush.bf16.msra.mxu0 0
        %627 = vmatpush.bf16.msra.mxu0 0
        %628 = vmatpush.bf16.msra.mxu0 0
        %629 = vmatpush.bf16.msra.mxu0 0
        %630 = vmatpush.bf16.msra.mxu0 0
        %631 = vmatpush.bf16.msra.mxu0 %v616
        %632 = vmatmul.bf16.gmra.mxu0 %v622
        %v633 = vpop.f32.mrf.mxu0
        %v634 = vadd.f32 0.0, %v633
        %v635 = vpop.f32.mrf.mxu0
        %636 = vdwg.mxu0
        %637 = vmatpush.bf16.msra.mxu0 0
        %638 = vmatpush.bf16.msra.mxu0 0
        %639 = vmatpush.bf16.msra.mxu0 0
        %640 = vmatpush.bf16.msra.mxu0 0
        %641 = vmatpush.bf16.msra.mxu0 0
        %642 = vmatpush.bf16.msra.mxu0 0
        %643 = vmatpush.bf16.msra.mxu0 0
        %644 = vmatpush.bf16.msra.mxu0 %v617
        %645 = vmatmul.bf16.gmra.mxu0 %v622
        %v646 = vpop.f32.mrf.mxu0
        %v647 = vadd.f32 0.0, %v646
        %v648 = vpop.f32.mrf.mxu0
        %649 = vdwg.mxu0
        %650 = vmatpush.bf16.msra.mxu0 0
        %651 = vmatpush.bf16.msra.mxu0 0
        %652 = vmatpush.bf16.msra.mxu0 0
        %653 = vmatpush.bf16.msra.mxu0 0
        %654 = vmatpush.bf16.msra.mxu0 0
        %655 = vmatpush.bf16.msra.mxu0 0
        %656 = vmatpush.bf16.msra.mxu0 0
        %657 = vmatpush.bf16.msra.mxu0 %v614
        %658 = vmatmul.bf16.gmra.mxu0 %v622
        %v659 = vpop.f32.mrf.mxu0
        %v660 = vadd.f32 0.0, %v659
        %v661 = vpop.f32.mrf.mxu0
        %662 = vdwg.mxu0
        %v663 = vadd.f32 %v604, %v634
        %v664 = vadd.f32 %v605, %v647
        %v665 = vadd.f32 %v606, %v660
        %s666 = scalar_lea.vmem [#allocation6], 20
        %v667 = vld [vmem:[%s666] sm:$0xf]
        %668 = vrot.lane.b32.xlu0 %v386, 123
        %v669 = vpop.permute.xlu0 %668
        %670 = vrot.lane.b32.xlu0 %v387, 123
        %v671 = vpop.permute.xlu0 %670
        %672 = vrot.lane.b32.xlu0 %v388, 123
        %v673 = vpop.permute.xlu0 %672
        %vm674 = vcmask 1006592
        %v675 = vsel %vm674, %v669, %v671
        %v676 = vsel %vm674, %v671, %v673
        %v681 = vsel %vm401, %v667, 0
        %683 = vmatpush.bf16.msra.mxu0 0
        %684 = vmatpush.bf16.msra.mxu0 0
        %685 = vmatpush.bf16.msra.mxu0 0
        %686 = vmatpush.bf16.msra.mxu0 0
        %687 = vmatpush.bf16.msra.mxu0 0
        %688 = vmatpush.bf16.msra.mxu0 0
        %689 = vmatpush.bf16.msra.mxu0 0
        %690 = vmatpush.bf16.msra.mxu0 %v675
        %691 = vmatmul.bf16.gmra.mxu0 %v681
        %v692 = vpop.f32.mrf.mxu0
        %v693 = vadd.f32 0.0, %v692
        %v694 = vpop.f32.mrf.mxu0
        %695 = vdwg.mxu0
        %696 = vmatpush.bf16.msra.mxu0 0
        %697 = vmatpush.bf16.msra.mxu0 0
        %698 = vmatpush.bf16.msra.mxu0 0
        %699 = vmatpush.bf16.msra.mxu0 0
        %700 = vmatpush.bf16.msra.mxu0 0
        %701 = vmatpush.bf16.msra.mxu0 0
        %702 = vmatpush.bf16.msra.mxu0 0
        %703 = vmatpush.bf16.msra.mxu0 %v676
        %704 = vmatmul.bf16.gmra.mxu0 %v681
        %v705 = vpop.f32.mrf.mxu0
        %v706 = vadd.f32 0.0, %v705
        %v707 = vpop.f32.mrf.mxu0
        %708 = vdwg.mxu0
        %709 = vmatpush.bf16.msra.mxu0 0
        %710 = vmatpush.bf16.msra.mxu0 0
        %711 = vmatpush.bf16.msra.mxu0 0
        %712 = vmatpush.bf16.msra.mxu0 0
        %713 = vmatpush.bf16.msra.mxu0 0
        %714 = vmatpush.bf16.msra.mxu0 0
        %715 = vmatpush.bf16.msra.mxu0 0
        %716 = vmatpush.bf16.msra.mxu0 %v673
        %717 = vmatmul.bf16.gmra.mxu0 %v681
        %v718 = vpop.f32.mrf.mxu0
        %v719 = vadd.f32 0.0, %v718
        %v720 = vpop.f32.mrf.mxu0
        %721 = vdwg.mxu0
        %v722 = vadd.f32 %v663, %v693
        %v723 = vadd.f32 %v664, %v706
        %v724 = vadd.f32 %v665, %v719
        %s725 = scalar_lea.vmem [#allocation6], 24
        %v726 = vld [vmem:[%s725] sm:$0xf]
        %727 = vrot.lane.b32.xlu0 %v386, 122
        %v728 = vpop.permute.xlu0 %727
        %729 = vrot.lane.b32.xlu0 %v387, 122
        %v730 = vpop.permute.xlu0 %729
        %731 = vrot.lane.b32.xlu0 %v388, 122
        %v732 = vpop.permute.xlu0 %731
        %vm733 = vcmask 998400
        %v734 = vsel %vm733, %v728, %v730
        %v735 = vsel %vm733, %v730, %v732
        %v740 = vsel %vm401, %v726, 0
        %742 = vmatpush.bf16.msra.mxu0 0
        %743 = vmatpush.bf16.msra.mxu0 0
        %744 = vmatpush.bf16.msra.mxu0 0
        %745 = vmatpush.bf16.msra.mxu0 0
        %746 = vmatpush.bf16.msra.mxu0 0
        %747 = vmatpush.bf16.msra.mxu0 0
        %748 = vmatpush.bf16.msra.mxu0 0
        %749 = vmatpush.bf16.msra.mxu0 %v734
        %750 = vmatmul.bf16.gmra.mxu0 %v740
        %v751 = vpop.f32.mrf.mxu0
        %v752 = vadd.f32 0.0, %v751
        %v753 = vpop.f32.mrf.mxu0
        %754 = vdwg.mxu0
        %755 = vmatpush.bf16.msra.mxu0 0
        %756 = vmatpush.bf16.msra.mxu0 0
        %757 = vmatpush.bf16.msra.mxu0 0
        %758 = vmatpush.bf16.msra.mxu0 0
        %759 = vmatpush.bf16.msra.mxu0 0
        %760 = vmatpush.bf16.msra.mxu0 0
        %761 = vmatpush.bf16.msra.mxu0 0
        %762 = vmatpush.bf16.msra.mxu0 %v735
        %763 = vmatmul.bf16.gmra.mxu0 %v740
        %v764 = vpop.f32.mrf.mxu0
        %v765 = vadd.f32 0.0, %v764
        %v766 = vpop.f32.mrf.mxu0
        %767 = vdwg.mxu0
        %768 = vmatpush.bf16.msra.mxu0 0
        %769 = vmatpush.bf16.msra.mxu0 0
        %770 = vmatpush.bf16.msra.mxu0 0
        %771 = vmatpush.bf16.msra.mxu0 0
        %772 = vmatpush.bf16.msra.mxu0 0
        %773 = vmatpush.bf16.msra.mxu0 0
        %774 = vmatpush.bf16.msra.mxu0 0
        %775 = vmatpush.bf16.msra.mxu0 %v732
        %776 = vmatmul.bf16.gmra.mxu0 %v740
        %v777 = vpop.f32.mrf.mxu0
        %v778 = vadd.f32 0.0, %v777
        %v779 = vpop.f32.mrf.mxu0
        %780 = vdwg.mxu0
        %v781 = vadd.f32 %v722, %v752
        %v782 = vadd.f32 %v723, %v765
        %v783 = vadd.f32 %v724, %v778
        %v784 = vld [vmem:[%s356] sm:$0xff]
        %v785 = vld [vmem:[%s356 + $0x8] sm:$0xf]
        %v786 = vld [vmem:[%s3] sm:$0xf]
        %789 = vst [vmem:[#allocation1] ss:$2 sm:$0xff] %v784
        %s790 = scalar_lea.vmem [#allocation1], 16
        %791 = vst [vmem:[%s790] ss:$2 sm:$0xff] %v785
        %v792 = vld.sshfl [vmem:[#allocation1] sm:$0xff pattern:$0x75316420]
        %v793 = vld.sshfl [vmem:[#allocation1 + $0x8] sm:$0xff pattern:$0x75316420]
        %v794 = vld.sshfl [vmem:[#allocation1 + $0x10] sm:$0xff pattern:$0x75316420]
        %v798 = vpack.c.bf16 %v792, %v792
        %v799 = vpack.c.bf16 %v793, %v793
        %v800 = vpack.c.bf16 %v794, %v794
        %v801 = vld [vmem:[%s356] sm:$0xff]
        %v802 = vld [vmem:[%s356 + $0x8] sm:$0xf]
        %s803 = scalar_lea.vmem %s3, 4
        %v804 = vld [vmem:[%s803] sm:$0xf]
        %807 = vst [vmem:[#allocation1] ss:$2 sm:$0xff] %v801
        %s808 = scalar_lea.vmem [#allocation1], 16
        %809 = vst [vmem:[%s808] ss:$2 sm:$0xff] %v802
        %v810 = vld.sshfl [vmem:[#allocation1] sm:$0xff pattern:$0x75316420]
        %v811 = vld.sshfl [vmem:[#allocation1 + $0x8] sm:$0xff pattern:$0x75316420]
        %v812 = vld.sshfl [vmem:[#allocation1 + $0x10] sm:$0xff pattern:$0x75316420]
        %v816 = vpack.c.bf16 %v810, %v810
        %v817 = vpack.c.bf16 %v811, %v811
        %v818 = vpack.c.bf16 %v812, %v812
        %822 = vrot.lane.b32.xlu0 %v816, 127
        %v823 = vpop.permute.xlu0 %822
        %824 = vrot.lane.b32.xlu0 %v817, 127
        %v825 = vpop.permute.xlu0 %824
        %826 = vrot.lane.b32.xlu0 %v818, 127
        %v827 = vpop.permute.xlu0 %826
        %v828 = vsel %vm395, %v823, %v825
        %v829 = vsel %vm395, %v825, %v827
        %vm830 = vcmask 31744
        %v832 = vsel %vm830, %v804, 0
        %vm834 = vcmask 1041408
        %v836 = vsel %vm834, %v828, 0
        %v839 = vsel %vm834, %v829, 0
        %v842 = vsel %vm834, %v827, 0
        %844 = vmatpush.bf16.msra.mxu0 0
        %845 = vmatpush.bf16.msra.mxu0 0
        %846 = vmatpush.bf16.msra.mxu0 0
        %847 = vmatpush.bf16.msra.mxu0 0
        %848 = vmatpush.bf16.msra.mxu0 0
        %849 = vmatpush.bf16.msra.mxu0 0
        %850 = vmatpush.bf16.msra.mxu0 0
        %851 = vmatpush.bf16.msra.mxu0 %v836
        %852 = vmatmul.bf16.gmra.mxu0 %v832
        %v853 = vpop.f32.mrf.mxu0
        %v854 = vadd.f32 0.0, %v853
        %v855 = vpop.f32.mrf.mxu0
        %856 = vdwg.mxu0
        %857 = vmatpush.bf16.msra.mxu0 0
        %858 = vmatpush.bf16.msra.mxu0 0
        %859 = vmatpush.bf16.msra.mxu0 0
        %860 = vmatpush.bf16.msra.mxu0 0
        %861 = vmatpush.bf16.msra.mxu0 0
        %862 = vmatpush.bf16.msra.mxu0 0
        %863 = vmatpush.bf16.msra.mxu0 0
        %864 = vmatpush.bf16.msra.mxu0 %v839
        %865 = vmatmul.bf16.gmra.mxu0 %v832
        %v866 = vpop.f32.mrf.mxu0
        %v867 = vadd.f32 0.0, %v866
        %v868 = vpop.f32.mrf.mxu0
        %869 = vdwg.mxu0
        %870 = vmatpush.bf16.msra.mxu0 0
        %871 = vmatpush.bf16.msra.mxu0 0
        %872 = vmatpush.bf16.msra.mxu0 0
        %873 = vmatpush.bf16.msra.mxu0 0
        %874 = vmatpush.bf16.msra.mxu0 0
        %875 = vmatpush.bf16.msra.mxu0 0
        %876 = vmatpush.bf16.msra.mxu0 0
        %877 = vmatpush.bf16.msra.mxu0 %v842
        %878 = vmatmul.bf16.gmra.mxu0 %v832
        %v879 = vpop.f32.mrf.mxu0
        %v880 = vadd.f32 0.0, %v879
        %v881 = vpop.f32.mrf.mxu0
        %882 = vdwg.mxu0
        %v884 = vsel %vm830, %v786, 0
        %v887 = vsel %vm834, %v798, 0
        %v890 = vsel %vm834, %v799, 0
        %v893 = vsel %vm834, %v800, 0
        %895 = vmatpush.bf16.msra.mxu0 0
        %896 = vmatpush.bf16.msra.mxu0 0
        %897 = vmatpush.bf16.msra.mxu0 0
        %898 = vmatpush.bf16.msra.mxu0 0
        %899 = vmatpush.bf16.msra.mxu0 0
        %900 = vmatpush.bf16.msra.mxu0 0
        %901 = vmatpush.bf16.msra.mxu0 0
        %902 = vmatpush.bf16.msra.mxu0 %v887
        %903 = vmatmul.bf16.gmra.mxu0 %v884
        %v904 = vpop.f32.mrf.mxu0
        %v905 = vadd.f32 %v854, %v904
        %v906 = vpop.f32.mrf.mxu0
        %907 = vdwg.mxu0
        %908 = vmatpush.bf16.msra.mxu0 0
        %909 = vmatpush.bf16.msra.mxu0 0
        %910 = vmatpush.bf16.msra.mxu0 0
        %911 = vmatpush.bf16.msra.mxu0 0
        %912 = vmatpush.bf16.msra.mxu0 0
        %913 = vmatpush.bf16.msra.mxu0 0
        %914 = vmatpush.bf16.msra.mxu0 0
        %915 = vmatpush.bf16.msra.mxu0 %v890
        %916 = vmatmul.bf16.gmra.mxu0 %v884
        %v917 = vpop.f32.mrf.mxu0
        %v918 = vadd.f32 %v867, %v917
        %v919 = vpop.f32.mrf.mxu0
        %920 = vdwg.mxu0
        %921 = vmatpush.bf16.msra.mxu0 0
        %922 = vmatpush.bf16.msra.mxu0 0
        %923 = vmatpush.bf16.msra.mxu0 0
        %924 = vmatpush.bf16.msra.mxu0 0
        %925 = vmatpush.bf16.msra.mxu0 0
        %926 = vmatpush.bf16.msra.mxu0 0
        %927 = vmatpush.bf16.msra.mxu0 0
        %928 = vmatpush.bf16.msra.mxu0 %v893
        %929 = vmatmul.bf16.gmra.mxu0 %v884
        %v930 = vpop.f32.mrf.mxu0
        %v931 = vadd.f32 %v880, %v930
        %v932 = vpop.f32.mrf.mxu0
        %933 = vdwg.mxu0
        %v934 = vld [vmem:[%s356] sm:$0xff]
        %v935 = vld [vmem:[%s356 + $0x8] sm:$0xf]
        %s936 = scalar_lea.vmem %s3, 8
        %v937 = vld [vmem:[%s936] sm:$0xf]
        %940 = vst [vmem:[#allocation1] ss:$2 sm:$0xff] %v934
        %s941 = scalar_lea.vmem [#allocation1], 16
        %942 = vst [vmem:[%s941] ss:$2 sm:$0xff] %v935
        %v943 = vld.sshfl [vmem:[#allocation1] sm:$0xff pattern:$0x75316420]
        %v944 = vld.sshfl [vmem:[#allocation1 + $0x8] sm:$0xff pattern:$0x75316420]
        %v945 = vld.sshfl [vmem:[#allocation1 + $0x10] sm:$0xff pattern:$0x75316420]
        %v949 = vpack.c.bf16 %v943, %v943
        %v950 = vpack.c.bf16 %v944, %v944
        %v951 = vpack.c.bf16 %v945, %v945
        %955 = vrot.lane.b32.xlu0 %v949, 126
        %v956 = vpop.permute.xlu0 %955
        %957 = vrot.lane.b32.xlu0 %v950, 126
        %v958 = vpop.permute.xlu0 %957
        %959 = vrot.lane.b32.xlu0 %v951, 126
        %v960 = vpop.permute.xlu0 %959
        %v961 = vsel %vm497, %v956, %v958
        %v962 = vsel %vm497, %v958, %v960
        %v964 = vsel %vm830, %v937, 0
        %v967 = vsel %vm834, %v961, 0
        %v970 = vsel %vm834, %v962, 0
        %v973 = vsel %vm834, %v960, 0
        %975 = vmatpush.bf16.msra.mxu0 0
        %976 = vmatpush.bf16.msra.mxu0 0
        %977 = vmatpush.bf16.msra.mxu0 0
        %978 = vmatpush.bf16.msra.mxu0 0
        %979 = vmatpush.bf16.msra.mxu0 0
        %980 = vmatpush.bf16.msra.mxu0 0
        %981 = vmatpush.bf16.msra.mxu0 0
        %982 = vmatpush.bf16.msra.mxu0 %v967
        %983 = vmatmul.bf16.gmra.mxu0 %v964
        %v984 = vpop.f32.mrf.mxu0
        %v985 = vadd.f32 0.0, %v984
        %v986 = vpop.f32.mrf.mxu0
        %987 = vdwg.mxu0
        %988 = vmatpush.bf16.msra.mxu0 0
        %989 = vmatpush.bf16.msra.mxu0 0
        %990 = vmatpush.bf16.msra.mxu0 0
        %991 = vmatpush.bf16.msra.mxu0 0
        %992 = vmatpush.bf16.msra.mxu0 0
        %993 = vmatpush.bf16.msra.mxu0 0
        %994 = vmatpush.bf16.msra.mxu0 0
        %995 = vmatpush.bf16.msra.mxu0 %v970
        %996 = vmatmul.bf16.gmra.mxu0 %v964
        %v997 = vpop.f32.mrf.mxu0
        %v998 = vadd.f32 0.0, %v997
        %v999 = vpop.f32.mrf.mxu0
        %1000 = vdwg.mxu0
        %1001 = vmatpush.bf16.msra.mxu0 0
        %1002 = vmatpush.bf16.msra.mxu0 0
        %1003 = vmatpush.bf16.msra.mxu0 0
        %1004 = vmatpush.bf16.msra.mxu0 0
        %1005 = vmatpush.bf16.msra.mxu0 0
        %1006 = vmatpush.bf16.msra.mxu0 0
        %1007 = vmatpush.bf16.msra.mxu0 0
        %1008 = vmatpush.bf16.msra.mxu0 %v973
        %1009 = vmatmul.bf16.gmra.mxu0 %v964
        %v1010 = vpop.f32.mrf.mxu0
        %v1011 = vadd.f32 0.0, %v1010
        %v1012 = vpop.f32.mrf.mxu0
        %1013 = vdwg.mxu0
        %v1014 = vadd.f32 %v905, %v985
        %v1015 = vadd.f32 %v918, %v998
        %v1016 = vadd.f32 %v931, %v1011
        %v1017 = vld [vmem:[%s356] sm:$0xff]
        %v1018 = vld [vmem:[%s356 + $0x8] sm:$0xf]
        %s1019 = scalar_lea.vmem %s3, 12
        %v1020 = vld [vmem:[%s1019] sm:$0xf]
        %1023 = vst [vmem:[#allocation1] ss:$2 sm:$0xff] %v1017
        %s1024 = scalar_lea.vmem [#allocation1], 16
        %1025 = vst [vmem:[%s1024] ss:$2 sm:$0xff] %v1018
        %v1026 = vld.sshfl [vmem:[#allocation1] sm:$0xff pattern:$0x75316420]
        %v1027 = vld.sshfl [vmem:[#allocation1 + $0x8] sm:$0xff pattern:$0x75316420]
        %v1028 = vld.sshfl [vmem:[#allocation1 + $0x10] sm:$0xff pattern:$0x75316420]
        %v1032 = vpack.c.bf16 %v1026, %v1026
        %v1033 = vpack.c.bf16 %v1027, %v1027
        %v1034 = vpack.c.bf16 %v1028, %v1028
        %1038 = vrot.lane.b32.xlu0 %v1032, 125
        %v1039 = vpop.permute.xlu0 %1038
        %1040 = vrot.lane.b32.xlu0 %v1033, 125
        %v1041 = vpop.permute.xlu0 %1040
        %1042 = vrot.lane.b32.xlu0 %v1034, 125
        %v1043 = vpop.permute.xlu0 %1042
        %v1044 = vsel %vm556, %v1039, %v1041
        %v1045 = vsel %vm556, %v1041, %v1043
        %v1047 = vsel %vm830, %v1020, 0
        %v1050 = vsel %vm834, %v1044, 0
        %v1053 = vsel %vm834, %v1045, 0
        %v1056 = vsel %vm834, %v1043, 0
        %1058 = vmatpush.bf16.msra.mxu0 0
        %1059 = vmatpush.bf16.msra.mxu0 0
        %1060 = vmatpush.bf16.msra.mxu0 0
        %1061 = vmatpush.bf16.msra.mxu0 0
        %1062 = vmatpush.bf16.msra.mxu0 0
        %1063 = vmatpush.bf16.msra.mxu0 0
        %1064 = vmatpush.bf16.msra.mxu0 0
        %1065 = vmatpush.bf16.msra.mxu0 %v1050
        %1066 = vmatmul.bf16.gmra.mxu0 %v1047
        %v1067 = vpop.f32.mrf.mxu0
        %v1068 = vadd.f32 0.0, %v1067
        %v1069 = vpop.f32.mrf.mxu0
        %1070 = vdwg.mxu0
        %1071 = vmatpush.bf16.msra.mxu0 0
        %1072 = vmatpush.bf16.msra.mxu0 0
        %1073 = vmatpush.bf16.msra.mxu0 0
        %1074 = vmatpush.bf16.msra.mxu0 0
        %1075 = vmatpush.bf16.msra.mxu0 0
        %1076 = vmatpush.bf16.msra.mxu0 0
        %1077 = vmatpush.bf16.msra.mxu0 0
        %1078 = vmatpush.bf16.msra.mxu0 %v1053
        %1079 = vmatmul.bf16.gmra.mxu0 %v1047
        %v1080 = vpop.f32.mrf.mxu0
        %v1081 = vadd.f32 0.0, %v1080
        %v1082 = vpop.f32.mrf.mxu0
        %1083 = vdwg.mxu0
        %1084 = vmatpush.bf16.msra.mxu0 0
        %1085 = vmatpush.bf16.msra.mxu0 0
        %1086 = vmatpush.bf16.msra.mxu0 0
        %1087 = vmatpush.bf16.msra.mxu0 0
        %1088 = vmatpush.bf16.msra.mxu0 0
        %1089 = vmatpush.bf16.msra.mxu0 0
        %1090 = vmatpush.bf16.msra.mxu0 0
        %1091 = vmatpush.bf16.msra.mxu0 %v1056
        %1092 = vmatmul.bf16.gmra.mxu0 %v1047
        %v1093 = vpop.f32.mrf.mxu0
        %v1094 = vadd.f32 0.0, %v1093
        %v1095 = vpop.f32.mrf.mxu0
        %1096 = vdwg.mxu0
        %v1097 = vadd.f32 %v1014, %v1068
        %v1098 = vadd.f32 %v1015, %v1081
        %v1099 = vadd.f32 %v1016, %v1094
        %1103 = vrot.lane.b32.xlu0 %v781, 24
        %v1104 = vpop.permute.xlu0 %1103
        %1105 = vrot.lane.b32.xlu0 %v782, 24
        %v1106 = vpop.permute.xlu0 %1105
        %1107 = vrot.lane.b32.xlu0 %v783, 24
        %v1108 = vpop.permute.xlu0 %1107
        %vm1109 = vcmask 195584
        %v1110 = vsel %vm1109, %v1104, %v1106
        %v1111 = vsel %vm1109, %v1106, %v1108
        %vm1116 = vcmask 1047744
        %1117 = vst.msk [vmem:[#allocation2] sm:$0xff] %vm1116, %v1104
        %1118 = vst [vmem:[#allocation2 + $0x8] sm:$0xff] %v1110
        %1119 = vst [vmem:[#allocation2 + $0x10] sm:$0xff] %v1111
        %vm1120 = vcmask 146432
        %1121 = vst.msk [vmem:[#allocation2 + $0x18] sm:$0xff] %vm1120, %v1108
        %v1122 = vld [vmem:[#allocation2] sm:$0xff]
        %v1123 = vld [vmem:[#allocation2 + $0x8] sm:$0xff]
        %v1124 = vld [vmem:[#allocation2 + $0x10] sm:$0xff]
        %v1125 = vld [vmem:[#allocation2 + $0x18] sm:$0xff]
        %1126 = vst.msk [vmem:[#allocation2] sm:$0xff] %vm1109, %v1125
        %v1127 = vld [vmem:[#allocation8] sm:$0xff]
        %vm1128 = vcmask 64512
        %v1130 = vsel %vm1128, %v1127, 0
        %1132 = vmatpush.msra.mxu0 0.0
        %1133 = vmatpush.msra.mxu0 0.0
        %1134 = vmatpush.msra.mxu0 0.0
        %1135 = vmatpush.msra.mxu0 0.0
        %1136 = vmatpush.msra.mxu0 0.0
        %1137 = vmatpush.msra.mxu0 0.0
        %1138 = vmatpush.msra.mxu0 0.0
        %1139 = vmatpush.msra.mxu0 0.0
        %1140 = vmatpush.msra.mxu0 0.0
        %1141 = vmatpush.msra.mxu0 0.0
        %1142 = vmatpush.msra.mxu0 0.0
        %1143 = vmatpush.msra.mxu0 0.0
        %1144 = vmatpush.msra.mxu0 0.0
        %1145 = vmatpush.msra.mxu0 0.0
        %1146 = vmatpush.msra.mxu0 0.0
        %1147 = vmatpush.msra.mxu0 %v1122
        %1148 = vmatmul.f32.gmra.mxu0 %v1130
        %v1149 = vpop.f32.mrf.mxu0
        %v1150 = vadd.f32 0.0, %v1149
        %1151 = vdwg.mxu0
        %1152 = vmatpush.msra.mxu0 0.0
        %1153 = vmatpush.msra.mxu0 0.0
        %1154 = vmatpush.msra.mxu0 0.0
        %1155 = vmatpush.msra.mxu0 0.0
        %1156 = vmatpush.msra.mxu0 0.0
        %1157 = vmatpush.msra.mxu0 0.0
        %1158 = vmatpush.msra.mxu0 0.0
        %1159 = vmatpush.msra.mxu0 0.0
        %1160 = vmatpush.msra.mxu0 0.0
        %1161 = vmatpush.msra.mxu0 0.0
        %1162 = vmatpush.msra.mxu0 0.0
        %1163 = vmatpush.msra.mxu0 0.0
        %1164 = vmatpush.msra.mxu0 0.0
        %1165 = vmatpush.msra.mxu0 0.0
        %1166 = vmatpush.msra.mxu0 0.0
        %1167 = vmatpush.msra.mxu0 %v1123
        %1168 = vmatmul.f32.gmra.mxu0 %v1130
        %v1169 = vpop.f32.mrf.mxu0
        %v1170 = vadd.f32 0.0, %v1169
        %1171 = vdwg.mxu0
        %1172 = vmatpush.msra.mxu0 0.0
        %1173 = vmatpush.msra.mxu0 0.0
        %1174 = vmatpush.msra.mxu0 0.0
        %1175 = vmatpush.msra.mxu0 0.0
        %1176 = vmatpush.msra.mxu0 0.0
        %1177 = vmatpush.msra.mxu0 0.0
        %1178 = vmatpush.msra.mxu0 0.0
        %1179 = vmatpush.msra.mxu0 0.0
        %1180 = vmatpush.msra.mxu0 0.0
        %1181 = vmatpush.msra.mxu0 0.0
        %1182 = vmatpush.msra.mxu0 0.0
        %1183 = vmatpush.msra.mxu0 0.0
        %1184 = vmatpush.msra.mxu0 0.0
        %1185 = vmatpush.msra.mxu0 0.0
        %1186 = vmatpush.msra.mxu0 0.0
        %1187 = vmatpush.msra.mxu0 %v1124
        %1188 = vmatmul.f32.gmra.mxu0 %v1130
        %v1189 = vpop.f32.mrf.mxu0
        %v1190 = vadd.f32 0.0, %v1189
        %1191 = vdwg.mxu0
        %v1192 = vadd.f32 %v1097, %v1150
        %v1193 = vadd.f32 %v1098, %v1170
        %v1194 = vadd.f32 %v1099, %v1190
        %v1195 = vtanh.pop %v781
        %v1196 = vtanh.pop %v782
        %v1197 = vtanh.pop %v783
        %v1198 = vxor.u32 %v781, 2147483648
        %v1199 = vxor.u32 %v782, 2147483648
        %v1200 = vxor.u32 %v783, 2147483648
        %v1201 = vmul.f32 %v1198, 1.442695
        %v1202 = vpow.pop %v1201
        %v1203 = vmul.f32 %v1199, 1.442695
        %v1204 = vpow.pop %v1203
        %v1205 = vmul.f32 %v1200, 1.442695
        %v1206 = vpow.pop %v1205
        %v1207 = vadd.f32 %v1202, 1.0
        %v1208 = vadd.f32 %v1204, 1.0
        %v1209 = vadd.f32 %v1206, 1.0
        %v1210 = vrcp.pop %v1207
        %v1211 = vmul.f32 %v1207, %v1210
        %v1212 = vsub.f32 1.0, %v1211
        %v1213 = vmul.f32 %v1210, %v1212
        %v1214 = vadd.f32 %v1210, %v1213
        %vm1215 = vweird.f32 %v1207
        %vm1216 = vweird.f32 %v1210
        %vm1217 = vmor %vm1215, %vm1216
        %v1218 = vsel %vm1217, %v1210, %v1214
        %v1219 = vand.u32 2147483647, %v1207
        %vm1220 = vcmp.eq.f32.partialorder %v1219, 8.507059e+37
        %v1221 = vand.u32 %v1207, 2147483648
        %v1222 = vor.u32 1.1754944e-38, %v1221
        %v1223 = vsel %vm1220, %v1222, %v1218
        %v1224 = vmul.f32 1.0, %v1223
        %v1225 = vrcp.pop %v1208
        %v1226 = vmul.f32 %v1208, %v1225
        %v1227 = vsub.f32 1.0, %v1226
        %v1228 = vmul.f32 %v1225, %v1227
        %v1229 = vadd.f32 %v1225, %v1228
        %vm1230 = vweird.f32 %v1208
        %vm1231 = vweird.f32 %v1225
        %vm1232 = vmor %vm1230, %vm1231
        %v1233 = vsel %vm1232, %v1225, %v1229
        %v1234 = vand.u32 2147483647, %v1208
        %vm1235 = vcmp.eq.f32.partialorder %v1234, 8.507059e+37
        %v1236 = vand.u32 %v1208, 2147483648
        %v1237 = vor.u32 1.1754944e-38, %v1236
        %v1238 = vsel %vm1235, %v1237, %v1233
        %v1239 = vmul.f32 1.0, %v1238
        %v1240 = vrcp.pop %v1209
        %v1241 = vmul.f32 %v1209, %v1240
        %v1242 = vsub.f32 1.0, %v1241
        %v1243 = vmul.f32 %v1240, %v1242
        %v1244 = vadd.f32 %v1240, %v1243
        %vm1245 = vweird.f32 %v1209
        %vm1246 = vweird.f32 %v1240
        %vm1247 = vmor %vm1245, %vm1246
        %v1248 = vsel %vm1247, %v1240, %v1244
        %v1249 = vand.u32 2147483647, %v1209
        %vm1250 = vcmp.eq.f32.partialorder %v1249, 8.507059e+37
        %v1251 = vand.u32 %v1209, 2147483648
        %v1252 = vor.u32 1.1754944e-38, %v1251
        %v1253 = vsel %vm1250, %v1252, %v1248
        %v1254 = vmul.f32 1.0, %v1253
        %v1258 = vrot.slane %v1224, 4
        %v1259 = vrot.slane %v1239, 4
        %v1260 = vrot.slane %v1254, 4
        %v1264 = vmul.f32 %v1195, %v1258
        %v1265 = vmul.f32 %v1196, %v1259
        %v1266 = vmul.f32 %v1197, %v1260
        %v1267 = vtanh.pop %v1192
        %v1268 = vtanh.pop %v1193
        %v1269 = vtanh.pop %v1194
        %v1270 = vxor.u32 %v1192, 2147483648
        %v1271 = vxor.u32 %v1193, 2147483648
        %v1272 = vxor.u32 %v1194, 2147483648
        %v1273 = vmul.f32 %v1270, 1.442695
        %v1274 = vpow.pop %v1273
        %v1275 = vmul.f32 %v1271, 1.442695
        %v1276 = vpow.pop %v1275
        %v1277 = vmul.f32 %v1272, 1.442695
        %v1278 = vpow.pop %v1277
        %v1279 = vadd.f32 %v1274, 1.0
        %v1280 = vadd.f32 %v1276, 1.0
        %v1281 = vadd.f32 %v1278, 1.0
        %v1282 = vrcp.pop %v1279
        %v1283 = vmul.f32 %v1279, %v1282
        %v1284 = vsub.f32 1.0, %v1283
        %v1285 = vmul.f32 %v1282, %v1284
        %v1286 = vadd.f32 %v1282, %v1285
        %vm1287 = vweird.f32 %v1279
        %vm1288 = vweird.f32 %v1282
        %vm1289 = vmor %vm1287, %vm1288
        %v1290 = vsel %vm1289, %v1282, %v1286
        %v1291 = vand.u32 2147483647, %v1279
        %vm1292 = vcmp.eq.f32.partialorder %v1291, 8.507059e+37
        %v1293 = vand.u32 %v1279, 2147483648
        %v1294 = vor.u32 1.1754944e-38, %v1293
        %v1295 = vsel %vm1292, %v1294, %v1290
        %v1296 = vmul.f32 1.0, %v1295
        %v1297 = vrcp.pop %v1280
        %v1298 = vmul.f32 %v1280, %v1297
        %v1299 = vsub.f32 1.0, %v1298
        %v1300 = vmul.f32 %v1297, %v1299
        %v1301 = vadd.f32 %v1297, %v1300
        %vm1302 = vweird.f32 %v1280
        %vm1303 = vweird.f32 %v1297
        %vm1304 = vmor %vm1302, %vm1303
        %v1305 = vsel %vm1304, %v1297, %v1301
        %v1306 = vand.u32 2147483647, %v1280
        %vm1307 = vcmp.eq.f32.partialorder %v1306, 8.507059e+37
        %v1308 = vand.u32 %v1280, 2147483648
        %v1309 = vor.u32 1.1754944e-38, %v1308
        %v1310 = vsel %vm1307, %v1309, %v1305
        %v1311 = vmul.f32 1.0, %v1310
        %v1312 = vrcp.pop %v1281
        %v1313 = vmul.f32 %v1281, %v1312
        %v1314 = vsub.f32 1.0, %v1313
        %v1315 = vmul.f32 %v1312, %v1314
        %v1316 = vadd.f32 %v1312, %v1315
        %vm1317 = vweird.f32 %v1281
        %vm1318 = vweird.f32 %v1312
        %vm1319 = vmor %vm1317, %vm1318
        %v1320 = vsel %vm1319, %v1312, %v1316
        %v1321 = vand.u32 2147483647, %v1281
        %vm1322 = vcmp.eq.f32.partialorder %v1321, 8.507059e+37
        %v1323 = vand.u32 %v1281, 2147483648
        %v1324 = vor.u32 1.1754944e-38, %v1323
        %v1325 = vsel %vm1322, %v1324, %v1320
        %v1326 = vmul.f32 1.0, %v1325
        %v1330 = vrot.slane %v1296, 4
        %v1331 = vrot.slane %v1311, 4
        %v1332 = vrot.slane %v1326, 4
        %v1336 = vmul.f32 %v1267, %v1330
        %v1337 = vmul.f32 %v1268, %v1331
        %v1338 = vmul.f32 %v1269, %v1332
        %v1339 = vld [vmem:[%s5] sm:$0xf]
        %v1341 = vsel %vm830, %v1339, 0
        %vm1343 = vcmask 1043456
        %v1345 = vsel %vm1343, %v1336, 0
        %v1348 = vsel %vm1343, %v1337, 0
        %v1351 = vsel %vm1343, %v1338, 0
        %1353 = vmatpush.msra.mxu0 0.0
        %1354 = vmatpush.msra.mxu0 0.0
        %1355 = vmatpush.msra.mxu0 0.0
        %1356 = vmatpush.msra.mxu0 0.0
        %1357 = vmatpush.msra.mxu0 0.0
        %1358 = vmatpush.msra.mxu0 0.0
        %1359 = vmatpush.msra.mxu0 0.0
        %1360 = vmatpush.msra.mxu0 0.0
        %1361 = vmatpush.msra.mxu0 0.0
        %1362 = vmatpush.msra.mxu0 0.0
        %1363 = vmatpush.msra.mxu0 0.0
        %1364 = vmatpush.msra.mxu0 0.0
        %1365 = vmatpush.msra.mxu0 0.0
        %1366 = vmatpush.msra.mxu0 0.0
        %1367 = vmatpush.msra.mxu0 0.0
        %1368 = vmatpush.msra.mxu0 %v1345
        %1369 = vmatmul.f32.gmra.mxu0 %v1341
        %v1370 = vpop.f32.mrf.mxu0
        %v1371 = vadd.f32 0.0, %v1370
        %1372 = vdwg.mxu0
        %1373 = vmatpush.msra.mxu0 0.0
        %1374 = vmatpush.msra.mxu0 0.0
        %1375 = vmatpush.msra.mxu0 0.0
        %1376 = vmatpush.msra.mxu0 0.0
        %1377 = vmatpush.msra.mxu0 0.0
        %1378 = vmatpush.msra.mxu0 0.0
        %1379 = vmatpush.msra.mxu0 0.0
        %1380 = vmatpush.msra.mxu0 0.0
        %1381 = vmatpush.msra.mxu0 0.0
        %1382 = vmatpush.msra.mxu0 0.0
        %1383 = vmatpush.msra.mxu0 0.0
        %1384 = vmatpush.msra.mxu0 0.0
        %1385 = vmatpush.msra.mxu0 0.0
        %1386 = vmatpush.msra.mxu0 0.0
        %1387 = vmatpush.msra.mxu0 0.0
        %1388 = vmatpush.msra.mxu0 %v1348
        %1389 = vmatmul.f32.gmra.mxu0 %v1341
        %v1390 = vpop.f32.mrf.mxu0
        %v1391 = vadd.f32 0.0, %v1390
        %1392 = vdwg.mxu0
        %1393 = vmatpush.msra.mxu0 0.0
        %1394 = vmatpush.msra.mxu0 0.0
        %1395 = vmatpush.msra.mxu0 0.0
        %1396 = vmatpush.msra.mxu0 0.0
        %1397 = vmatpush.msra.mxu0 0.0
        %1398 = vmatpush.msra.mxu0 0.0
        %1399 = vmatpush.msra.mxu0 0.0
        %1400 = vmatpush.msra.mxu0 0.0
        %1401 = vmatpush.msra.mxu0 0.0
        %1402 = vmatpush.msra.mxu0 0.0
        %1403 = vmatpush.msra.mxu0 0.0
        %1404 = vmatpush.msra.mxu0 0.0
        %1405 = vmatpush.msra.mxu0 0.0
        %1406 = vmatpush.msra.mxu0 0.0
        %1407 = vmatpush.msra.mxu0 0.0
        %1408 = vmatpush.msra.mxu0 %v1351
        %1409 = vmatmul.f32.gmra.mxu0 %v1341
        %v1410 = vpop.f32.mrf.mxu0
        %v1411 = vadd.f32 0.0, %v1410
        %1412 = vdwg.mxu0
        %v1416 = vrot.slane %v1391, 4
        %v1417 = vsel %vm1343, %v1371, %v1416
        %1418 = vrot.lane.b32.xlu0 %v1417, 3
        %v1419 = vpop.permute.xlu0 %1418
        %1420 = vrot.lane.b32.xlu0 %v1411, 3
        %v1421 = vpop.permute.xlu0 %1420
        %v1422 = vrot.slane %v1419, 4
        %vm1423 = vcmask 23552
        %v1424 = vsel %vm1423, %v1422, %v1419
        %v1425 = vsel %vm1423, %v1422, %v1421
        %v1428 = vadd.f32 %v1017, %v1424
        %v1429 = vadd.f32 %v1018, %v1425
        %1430 = vst [vmem:[%s346] sm:$0xf] %v1264
        %1431 = vst [vmem:[%s346 + $0x8] sm:$0xf] %v1265
        %vm1432 = vcmask 994304
        %1433 = vst.msk [vmem:[%s346 + $0x10] sm:$0xf] %vm1432, %v1266
        %s1436 = scalar_lea.vmem [#allocation1], 1
        %1437 = vst [vmem:[%s1436] ss:$2 sm:$0xff] %v1428
        %s1438 = scalar_lea.vmem [#allocation1], 17
        %1439 = vst [vmem:[%s1438] ss:$2 sm:$0xff] %v1429
        %v1440 = vld.sshfl [vmem:[#allocation1] sm:$0xff pattern:$0x75316420]
        %v1441 = vld.sshfl [vmem:[#allocation1 + $0x8] sm:$0xff pattern:$0x75316420]
        %v1442 = vld.sshfl [vmem:[#allocation1 + $0x10] sm:$0xff pattern:$0x75316420]
        %1443 = vrot.lane.b32.xlu0 %v1440, 125
        %v1444 = vpop.permute.xlu0 %1443
        %1445 = vrot.lane.b32.xlu0 %v1441, 125
        %v1446 = vpop.permute.xlu0 %1445
        %1447 = vrot.lane.b32.xlu0 %v1442, 125
        %v1448 = vpop.permute.xlu0 %1447
        %vm1449 = vcmask 1022976
        %v1450 = vsel %vm1449, %v1444, %v1446
        %v1451 = vsel %vm1449, %v1446, %v1448
        %1455 = vst [vmem:[%s346] sm:$0xf0] %v1450
        %1456 = vst [vmem:[%s346 + $0x8] sm:$0xf0] %v1451
        %vm1457 = vcmask 998404
        %1458 = vst.msk [vmem:[%s346 + $0x10] sm:$0xf0] %vm1457, %v1448
        %s1459 = sand.u32 %s186, 1
        %s1460 = scalar_lea.sflag [#allocation5], %s1459
        %s1461 = sand.u32 %s186, 1
        %s1462 = smul.addr %s1461, 24
        %s1463 = scalar_lea.vmem [#allocation9], %s1462
        // Predicated region
        $region61: #{tpu_custom_call.1} parent=43 // pred_check
          %p1464 = pneg %p196
        $region62: #{tpu_custom_call.1} parent=43 // pred_check_branch
          %1466 = sbr.rel (%p1464) target = $region64
        $region63: #{tpu_custom_call.1} parent=43 // pred_region
          %s1467 = smul.u32 3, %s29
          %1469 = vsyncadd %s1460, 0
          %s1470 = smul.addr %s28, 3
          %s1471 = sadd.s32 %s1467, %s1470
          %s1472 = smul.addr %s1471, 8
          %s1473 = scalar_lea.hbm %s6, %s1472
          %s1475 = sshll.u32 %s1463, 4
          %s1476 = int_to_ptr.vmem [resolvable:$true] %s1475
          %s1477 = sshll.u32 %s1473, 4
          %s1478 = int_to_ptr.hbm [resolvable:$true] %s1477
          %1480 = dma.vmem_to_hbm [thread:$0]  %s1476, 384, %s1478, %s1460
        $region64: #{tpu_custom_call.1} parent=43 // pred_fallthru
          _
      $region44: #{tpu_custom_call.1} parent=5 // pred_fallthru
        _
      %p1481 = scmp.le.s32.totalorder 2, %s19
      // Predicated region
      $region65: #{tpu_custom_call.1} parent=5 // pred_check
        %p1482 = pneg %p1481
      $region66: #{tpu_custom_call.1} parent=5 // pred_check_branch
        %1484 = sbr.rel (%p1482) target = $region68
      $region67: #{tpu_custom_call.1} parent=5 // pred_region
        %s1485 = ssub.s32 %s19, 2
        // Predicated region
        $region69: #{tpu_custom_call.1} parent=67 // pred_check
          %p1486 = pneg %p202
        $region70: #{tpu_custom_call.1} parent=67 // pred_check_branch
          %1488 = sbr.rel (%p1486) target = $region72
        $region71: #{tpu_custom_call.1} parent=67 // pred_region
          %s1489 = sand.u32 %s187, 1
          %s1490 = scalar_lea.sflag [#allocation5], %s1489
          %s1491 = sand.u32 %s187, 1
          %s1492 = smul.addr %s1491, 24
          %s1493 = scalar_lea.vmem [#allocation9], %s1492
          %1495 = dma.done %s1490, 384
        $region72: #{tpu_custom_call.1} parent=67 // pred_fallthru
          _
      $region68: #{tpu_custom_call.1} parent=5 // pred_fallthru
        _
    $region6: #{tpu_custom_call.1} parent=1 // loop_footer
      %s23 = sadd.s32 1, %s19
    $region7: #{tpu_custom_call.1} parent=1 // loop_footer_branch
      %18 = sbr.rel target = $region3
    $region8: #{tpu_custom_call.1} parent=1 // loop_exit
      _
    %1496 = vsyncpa [#allocation4], 1
    %s1497 = scalar_lea.sflag [#allocation4], 1
    %1498 = vsyncpa %s1497, 1
    %1499 = vsyncpa [#allocation7], 1
    %1500 = vsyncpa [#allocation5], 1
    %s1501 = scalar_lea.sflag [#allocation5], 1
    %1502 = vsyncpa %s1501, 1

</llo_original>
